<compile_context>
chip_gen: v7x
topology: tpu7x:2x2x1
jax: 0.10.0
libtpu: 0.0.40
codegen_flags: <defaults>
</compile_context>

<pallas_src>
import functools

import jax
import jax.numpy as jnp
from jax.experimental import pallas as pl
from jax.experimental.pallas import tpu as pltpu


def _head_kernel(x_ref, w1_ref, b1_ref, w2_ref, b2_ref, out_ref):
    # x_ref : (Bp, H)      bf16  CLS embeddings (resident across grid steps)
    # w1_ref: (H, tn)      bf16  fc1 weight column-chunk
    # b1_ref: (1, tn)      f32   fc1 bias chunk
    # w2_ref: (tn, Cp)     f32   fc2 weight row-chunk (zero-padded to 128 lanes)
    # b2_ref: (1, Cp)      f32   fc2 bias (zero-padded), added on chunk 0 only
    # out_ref: (1, Bp, Cp) f32   (partial) logits contributed by this chunk
    h = jnp.dot(x_ref[...], w1_ref[...], preferred_element_type=jnp.float32)
    h = jnp.tanh(h + b1_ref[...])
    # TODO(synk): dropout before fc1 / between fc1 and fc2 is identity (eval mode).
    acc = jnp.dot(h, w2_ref[...], preferred_element_type=jnp.float32)

    @pl.when(pl.program_id(0) == 0)
    def _():
        out_ref[0] = acc + b2_ref[...]

    @pl.when(pl.program_id(0) != 0)
    def _():
        out_ref[0] = acc


def _round_up(x, m):
    return (x + m - 1) // m * m


def prepare_head_params(w1, b1, w2, b2):
    """One-time (model-load) parameter prep.

    w1: (H, H), b1: (H,), w2: (H, C), b2: (C,), all stored as (in, out),
    i.e. the transpose of the PyTorch nn.Linear weight layout.
    Returns (w1_bf16, b1_f32_2d, w2_f32_padded, b2_f32_padded, n_classes).
    """
    H = w1.shape[0]
    C = w2.shape[1]
    Cp = max(128, _round_up(C, 128))
    w1_bf = jnp.asarray(w1, jnp.bfloat16)
    b1_2d = jnp.asarray(b1, jnp.float32).reshape(1, H)
    w2_p = jnp.pad(jnp.asarray(w2, jnp.float32), ((0, 0), (0, Cp - C)))
    b2_p = jnp.pad(jnp.asarray(b2, jnp.float32), (0, Cp - C)).reshape(1, Cp)
    return w1_bf, b1_2d, w2_p, b2_p, C


@functools.partial(jax.jit, static_argnames=("n_classes", "nb"))
def codesecura_head(hidden_states, w1_bf, b1_2d, w2_p, b2_p, *, n_classes, nb=1):
    """hidden_states: (B, S, H).  Other args come from prepare_head_params.

    nb=1 (default): single-step kernel, full epilogue in-kernel (v5e/v6e).
    nb=2: balanced megacore split of the w1 stream on v7x (tn=384).
    Returns logits (B, n_classes) in float32.
    """
    B, S, H = hidden_states.shape
    Cp = w2_p.shape[1]
    if nb < 1 or H % nb != 0 or (H // nb) % 128 != 0:
        nb = 1                            # fall back to a single chunk
    tn = H // nb

    Bp = max(8, _round_up(B, 8))          # sublane-dense batch

    # Glue in plain XLA: CLS select + tiny pad + bf16 cast of x (~48 KB).
    cls = hidden_states[:, 0, :]
    x = jnp.pad(cls, ((0, Bp - B), (0, 0))).astype(jnp.bfloat16)

    grid_spec = pltpu.PrefetchScalarGridSpec(
        num_scalar_prefetch=0,
        grid=(nb,),
        in_specs=[
            pl.BlockSpec((Bp, H), lambda i: (0, 0)),     # x: resident
            pl.BlockSpec((H, tn), lambda i: (0, i)),     # w1 column chunk
            pl.BlockSpec((1, tn), lambda i: (0, i)),     # b1 chunk
            pl.BlockSpec((tn, Cp), lambda i: (i, 0)),    # w2 row chunk
            pl.BlockSpec((1, Cp), lambda i: (0, 0)),     # b2: resident
        ],
        out_specs=pl.BlockSpec((1, Bp, Cp), lambda i: (i, 0, 0)),
    )

    bytes_accessed = (x.size * 2 + w1_bf.size * 2 + b1_2d.size * 4
                      + w2_p.size * 4 + b2_p.size * 4 + nb * Bp * Cp * 4)

    partials = pl.pallas_call(
        _head_kernel,
        out_shape=jax.ShapeDtypeStruct((nb, Bp, Cp), jnp.float32),
        grid_spec=grid_spec,
        compiler_params=pltpu.CompilerParams(
            dimension_semantics=("parallel",)),
        cost_estimate=pl.CostEstimate(
            flops=2 * Bp * H * (H + Cp),
            transcendentals=Bp * H,
            bytes_accessed=bytes_accessed),
    )(x, w1_bf, b1_2d, w2_p, b2_p)

    if nb == 1:
        logits = partials[0]              # finished logits (bias already added)
    else:
        logits = jnp.sum(partials, axis=0)  # tiny nb-way add (v7x megacore path)
    return logits[:B, :n_classes]


def reference_head(hidden_states, w1, b1, w2, b2):
    cls = hidden_states[:, 0, :]
    h = jnp.tanh(cls @ w1 + b1)
    return h @ w2 + b2


if __name__ == "__main__":
    B, S, H, C = 2, 8, 768, 4   # batch, seq, hidden (fc1 is 768x768), n_classes

    key = jax.random.PRNGKey(0)
    k_x, k_w1, k_b1, k_w2, k_b2 = jax.random.split(key, 5)

    # Deterministic synthetic parameters (stored as (in, out), i.e. W^T of the
    # PyTorch nn.Linear weight layout).
    hidden_states = jax.random.normal(k_x, (B, S, H), dtype=jnp.float32)
    w1 = jax.random.normal(k_w1, (H, H), dtype=jnp.float32) * 0.02
    b1 = jax.random.normal(k_b1, (H,), dtype=jnp.float32) * 0.02
    w2 = jax.random.normal(k_w2, (H, C), dtype=jnp.float32) * 0.02
    b2 = jax.random.normal(k_b2, (C,), dtype=jnp.float32) * 0.02

    # One-time weight prep (outside the jitted call, per perf review).
    w1_bf, b1_2d, w2_p, b2_p, n_classes = prepare_head_params(w1, b1, w2, b2)

    ref_f32 = reference_head(hidden_states, w1, b1, w2, b2)

    # nb=1: single-step variant (v5e/v6e); nb=2: balanced megacore split (v7x).
    for nb in (1, 2):
        logits = codesecura_head(hidden_states, w1_bf, b1_2d, w2_p, b2_p,
                                 n_classes=n_classes, nb=nb)
        jax.block_until_ready(logits)
        assert logits.shape == (B, C)
        # bf16 x / bf16 w1 streaming -> loosened tolerance vs the f32 reference.
        assert jnp.allclose(logits, ref_f32, atol=2e-2, rtol=2e-2), \
            f"mismatch vs reference (nb={nb})"

    print("KERNEL_OK")
</pallas_src>

<mosaic_0001>
module attributes {stable_mosaic.version = 11 : i64} {
  func.func @_head_kernel(%arg0: i32, %arg1: memref<8x768xbf16, #tpu.memory_space<vmem>>, %arg2: memref<768x768xbf16, #tpu.memory_space<vmem>>, %arg3: memref<1x768xf32, #tpu.memory_space<vmem>>, %arg4: memref<768x128xf32, #tpu.memory_space<vmem>>, %arg5: memref<1x128xf32, #tpu.memory_space<vmem>>, %arg6: memref<1x8x128xf32, #tpu.memory_space<vmem>>) attributes {dimension_semantics = [#tpu.dimension_semantics<parallel>], iteration_bounds = array<i64: 1>, scalar_prefetch = 0 : i64, scratch_operands = 0 : i64, tpu.core_type = #tpu.core_type<tc>, window_params = [{pipeline_mode = #tpu.pipeline_mode<synchronous>, transform_indices = @transform_0, window_bounds = array<i64: 8, 768>}, {transform_indices = @transform_1, window_bounds = array<i64: 768, 768>}, {transform_indices = @transform_2, window_bounds = array<i64: 1, 768>}, {transform_indices = @transform_3, window_bounds = array<i64: 768, 128>}, {pipeline_mode = #tpu.pipeline_mode<synchronous>, transform_indices = @transform_4, window_bounds = array<i64: 1, 128>}, {transform_indices = @transform_5, window_bounds = array<i64: 1, 8, 128>}]} {
    %c0 = arith.constant 0 : index
    %c0_0 = arith.constant 0 : index
    %0 = vector.load %arg1[%c0, %c0_0] : memref<8x768xbf16, #tpu.memory_space<vmem>>, vector<8x768xbf16>
    %c0_1 = arith.constant 0 : index
    %c0_2 = arith.constant 0 : index
    %1 = vector.load %arg2[%c0_1, %c0_2] : memref<768x768xbf16, #tpu.memory_space<vmem>>, vector<768x768xbf16>
    %cst = arith.constant dense<0.000000e+00> : vector<8x768xf32>
    %2 = tpu.matmul %0, %1, %cst {dimension_numbers = #tpu.dot_dimension_numbers<[1], [0], [0], [1], [0, 0, 1, 1], [], []>} : vector<8x768xbf16>, vector<768x768xbf16>, vector<8x768xf32> -> vector<8x768xf32>
    %c0_3 = arith.constant 0 : index
    %c0_4 = arith.constant 0 : index
    %3 = vector.load %arg3[%c0_3, %c0_4] : memref<1x768xf32, #tpu.memory_space<vmem>>, vector<1x768xf32>
    %4 = vector.broadcast %3 : vector<1x768xf32> to vector<8x768xf32>
    %5 = arith.addf %2, %4 : vector<8x768xf32>
    %6 = math.tanh %5 : vector<8x768xf32>
    %c0_5 = arith.constant 0 : index
    %c0_6 = arith.constant 0 : index
    %7 = vector.load %arg4[%c0_5, %c0_6] : memref<768x128xf32, #tpu.memory_space<vmem>>, vector<768x128xf32>
    %cst_7 = arith.constant dense<0.000000e+00> : vector<8x128xf32>
    %8 = tpu.matmul %6, %7, %cst_7 {dimension_numbers = #tpu.dot_dimension_numbers<[1], [0], [0], [1], [0, 0, 1, 1], [], []>} : vector<8x768xf32>, vector<768x128xf32>, vector<8x128xf32> -> vector<8x128xf32>
    %c0_i32 = arith.constant 0 : i32
    %9 = arith.cmpi eq, %arg0, %c0_i32 : i32
    %10 = arith.extui %9 : i1 to i32
    %c0_i32_8 = arith.constant 0 : i32
    %11 = arith.cmpi ne, %10, %c0_i32_8 : i32
    scf.if %11 {
      %c0_11 = arith.constant 0 : index
      %c0_12 = arith.constant 0 : index
      %15 = vector.load %arg5[%c0_11, %c0_12] : memref<1x128xf32, #tpu.memory_space<vmem>>, vector<1x128xf32>
      %16 = vector.broadcast %15 : vector<1x128xf32> to vector<8x128xf32>
      %17 = arith.addf %8, %16 : vector<8x128xf32>
      %c0_13 = arith.constant 0 : index
      %c0_14 = arith.constant 0 : index
      %c0_15 = arith.constant 0 : index
      %18 = vector.load %arg6[%c0_13, %c0_14, %c0_15] : memref<1x8x128xf32, #tpu.memory_space<vmem>>, vector<1x8x128xf32>
      %19 = vector.shape_cast %18 : vector<1x8x128xf32> to vector<8x128xf32>
      %20 = vector.shape_cast %17 : vector<8x128xf32> to vector<1x8x128xf32>
      tpu.vector_store %arg6[%c0_13, %c0_14, %c0_15], %20 {strides = array<i32>} : memref<1x8x128xf32, #tpu.memory_space<vmem>>, vector<1x8x128xf32>,
    } else {
    }
    %c0_i32_9 = arith.constant 0 : i32
    %12 = arith.cmpi ne, %arg0, %c0_i32_9 : i32
    %13 = arith.extui %12 : i1 to i32
    %c0_i32_10 = arith.constant 0 : i32
    %14 = arith.cmpi ne, %13, %c0_i32_10 : i32
    scf.if %14 {
      %c0_11 = arith.constant 0 : index
      %c0_12 = arith.constant 0 : index
      %c0_13 = arith.constant 0 : index
      %15 = vector.load %arg6[%c0_11, %c0_12, %c0_13] : memref<1x8x128xf32, #tpu.memory_space<vmem>>, vector<1x8x128xf32>
      %16 = vector.shape_cast %15 : vector<1x8x128xf32> to vector<8x128xf32>
      %17 = vector.shape_cast %8 : vector<8x128xf32> to vector<1x8x128xf32>
      tpu.vector_store %arg6[%c0_11, %c0_12, %c0_13], %17 {strides = array<i32>} : memref<1x8x128xf32, #tpu.memory_space<vmem>>, vector<1x8x128xf32>,
    } else {
    }
    return
  }
  func.func @transform_0(%arg0: i32) -> (i32, i32) {
    %c0_i32 = arith.constant 0 : i32
    %c0_i32_0 = arith.constant 0 : i32
    %c0_i32_1 = arith.constant 0 : i32
    return %c0_i32, %c0_i32_0 : i32, i32
  }
  func.func @transform_1(%arg0: i32) -> (i32, i32) {
    %c0_i32 = arith.constant 0 : i32
    %c0_i32_0 = arith.constant 0 : i32
    return %c0_i32, %arg0 : i32, i32
  }
  func.func @transform_2(%arg0: i32) -> (i32, i32) {
    %c0_i32 = arith.constant 0 : i32
    %c0_i32_0 = arith.constant 0 : i32
    return %c0_i32, %arg0 : i32, i32
  }
  func.func @transform_3(%arg0: i32) -> (i32, i32) {
    %c0_i32 = arith.constant 0 : i32
    %c0_i32_0 = arith.constant 0 : i32
    return %arg0, %c0_i32 : i32, i32
  }
  func.func @transform_4(%arg0: i32) -> (i32, i32) {
    %c0_i32 = arith.constant 0 : i32
    %c0_i32_0 = arith.constant 0 : i32
    %c0_i32_1 = arith.constant 0 : i32
    return %c0_i32, %c0_i32_0 : i32, i32
  }
  func.func @transform_5(%arg0: i32) -> (i32, i32, i32) {
    %c0_i32 = arith.constant 0 : i32
    %c0_i32_0 = arith.constant 0 : i32
    %c0_i32_1 = arith.constant 0 : i32
    return %arg0, %c0_i32, %c0_i32_0 : i32, i32, i32
  }
}

</mosaic_0001>

<llo_original>
// kernel: codesecura_head.1
$region0: #{codesecura_head.1}
  #allocation0 [shape = 'u32[]', space=smem, size = 0x4, offset = 0x4, fixed_abs, tag = 'smem constant byte address 0x4 - core index']
  #allocation1 [shape = 'u32[144,128]{1,0:T(1,128)}', space=vmem, size = 0x12000, scoped, tag = 'internal scratch']
  %s0 = inlined_call_operand.vmem [shape: bf16[8,768], index: 0, kind: input, shape index: {}]
  %s1 = inlined_call_operand.hbm [shape: bf16[768,768], index: 1, kind: input, shape index: {}]
  %s2 = inlined_call_operand.hbm [shape: f32[1,768], index: 2, kind: input, shape index: {}]
  %s3 = inlined_call_operand.hbm [shape: f32[768,128], index: 3, kind: input, shape index: {}]
  %s4 = inlined_call_operand.hbm [shape: f32[1,128], index: 4, kind: input, shape index: {}]
  %s5 = inlined_call_operand.vmem [shape: f32[1,8,128], index: 5, kind: output, shape index: {}]
  %s6 = sld [smem:[#allocation0]]
  $region54: #{codesecura_head.1} parent=0
    _
  %s8 = ssub.s32 1, %s6
  %s9 = scalar_select 0, %s8, %s6
  $region1: #{codesecura_head.1} parent=0
    #allocation2 [shape = 'u8[1179648]{0}', space=vmem, size = 0x120000, scoped, tag = 'input window, operand 1, single buffered']
    #allocation3 [shape = 's32[1]{0}', space=sflag, size = 0x4, scoped, tag = 'scoped memory for codesecura_head.1']
    #allocation4 [shape = 'u8[3072]{0}', space=vmem, size = 0xc00, scoped, tag = 'input window, operand 2, single buffered']
    #allocation5 [shape = 's32[1]{0}', space=sflag, size = 0x4, scoped, tag = 'scoped memory for codesecura_head.1']
    #allocation6 [shape = 'u8[393216]{0}', space=vmem, size = 0x60000, scoped, tag = 'input window, operand 3, single buffered']
    #allocation7 [shape = 'u8[512]{0}', space=vmem, size = 0x400, scoped, tag = 'input window, operand 4, single buffered']
    #allocation8 [shape = 's32[1]{0}', space=sflag, size = 0x4, scoped, tag = 'scoped memory for codesecura_head.1']
    %10 = vsyncpa [#allocation3], 0
    %11 = vsyncpa [#allocation5], 0
    %12 = vsyncpa [#allocation8], 0
    // Predicated region
    $region2: #{codesecura_head.1} parent=1 // pred_check
      _
    $region3: #{codesecura_head.1} parent=1 // pred_check_branch
      %14 = sbr.rel (0) target = $region5
    $region4: #{codesecura_head.1} parent=1 // pred_region
      _
    $region5: #{codesecura_head.1} parent=1 // pred_fallthru
      _
    // Predicated region
    $region6: #{codesecura_head.1} parent=1 // pred_check
      _
    $region7: #{codesecura_head.1} parent=1 // pred_check_branch
      %16 = sbr.rel (0) target = $region9
    $region8: #{codesecura_head.1} parent=1 // pred_region
      %s18 = ssub.s32 36864, 36864
      %19 = vsyncadd [#allocation3], %s18
      %s20 = sshll.u32 [#allocation2], 4
      %s21 = int_to_ptr.vmem [resolvable:$true] %s20
      %26 = dma.hbm_to_vmem [thread:$0]  %s1, 36864, %s21, [#allocation3], 384, 384, 24
    $region9: #{codesecura_head.1} parent=1 // pred_fallthru
      _
    // Predicated region
    $region10: #{codesecura_head.1} parent=1 // pred_check
      _
    $region11: #{codesecura_head.1} parent=1 // pred_check_branch
      %28 = sbr.rel (0) target = $region13
    $region12: #{codesecura_head.1} parent=1 // pred_region
      %s30 = ssub.s32 96, 96
      %31 = vsyncadd [#allocation5], %s30
      %s33 = sshll.u32 [#allocation4], 4
      %s34 = int_to_ptr.vmem [resolvable:$true] %s33
      %36 = dma.hbm_to_vmem [thread:$0]  %s2, 96, %s34, [#allocation5]
    $region13: #{codesecura_head.1} parent=1 // pred_fallthru
      _
    // Predicated region
    $region14: #{codesecura_head.1} parent=1 // pred_check
      _
    $region15: #{codesecura_head.1} parent=1 // pred_check_branch
      %38 = sbr.rel (0) target = $region17
    $region16: #{codesecura_head.1} parent=1 // pred_region
      %s40 = ssub.s32 12288, 12288
      %41 = vsyncadd [#allocation5], %s40
      %s42 = sshll.u32 [#allocation6], 4
      %s43 = int_to_ptr.vmem [resolvable:$true] %s42
      %48 = dma.hbm_to_vmem [thread:$0]  %s3, 12288, %s43, [#allocation5], 128, 128, 8
    $region17: #{codesecura_head.1} parent=1 // pred_fallthru
      _
    // Predicated region
    $region18: #{codesecura_head.1} parent=1 // pred_check
      _
    $region19: #{codesecura_head.1} parent=1 // pred_check_branch
      %50 = sbr.rel (0) target = $region21
    $region20: #{codesecura_head.1} parent=1 // pred_region
      %s52 = ssub.s32 16, 16
      %53 = vsyncadd [#allocation8], %s52
      %s55 = sshll.u32 [#allocation7], 4
      %s56 = int_to_ptr.vmem [resolvable:$true] %s55
      %58 = dma.hbm_to_vmem [thread:$0]  %s4, 16, %s56, [#allocation8]
    $region21: #{codesecura_head.1} parent=1 // pred_fallthru
      _
    // Predicated region
    $region22: #{codesecura_head.1} parent=1 // pred_check
      _
    $region23: #{codesecura_head.1} parent=1 // pred_check_branch
      %60 = sbr.rel (0) target = $region25
    $region24: #{codesecura_head.1} parent=1 // pred_region
      %61 = dma.done [#allocation3], 36864
    $region25: #{codesecura_head.1} parent=1 // pred_fallthru
      _
    // Predicated region
    $region26: #{codesecura_head.1} parent=1 // pred_check
      _
    $region27: #{codesecura_head.1} parent=1 // pred_check_branch
      %63 = sbr.rel (0) target = $region29
    $region28: #{codesecura_head.1} parent=1 // pred_region
      %64 = dma.done [#allocation5], 96
    $region29: #{codesecura_head.1} parent=1 // pred_fallthru
      _
    // Predicated region
    $region30: #{codesecura_head.1} parent=1 // pred_check
      _
    $region31: #{codesecura_head.1} parent=1 // pred_check_branch
      %66 = sbr.rel (0) target = $region33
    $region32: #{codesecura_head.1} parent=1 // pred_region
      %67 = dma.done [#allocation5], 12288
    $region33: #{codesecura_head.1} parent=1 // pred_fallthru
      _
    // Predicated region
    $region34: #{codesecura_head.1} parent=1 // pred_check
      _
    $region35: #{codesecura_head.1} parent=1 // pred_check_branch
      %69 = sbr.rel (0) target = $region37
    $region36: #{codesecura_head.1} parent=1 // pred_region
      %70 = dma.done [#allocation8], 16
    $region37: #{codesecura_head.1} parent=1 // pred_fallthru
      _
    %v71 = vld [vmem:[%s0] sm:$0xff]
    %v72 = vld [vmem:[%s0 + $0x8] sm:$0xff]
    %v73 = vld [vmem:[%s0 + $0x10] sm:$0xff]
    %v74 = vld [vmem:[#allocation2] sm:$0xff]
    %v75 = vld [vmem:[#allocation2 + $0x8] sm:$0xff]
    %v76 = vld [vmem:[#allocation2 + $0x10] sm:$0xff]
    %v77 = vld [vmem:[#allocation2 + $0x18] sm:$0xff]
    %v78 = vld [vmem:[#allocation2 + $0x20] sm:$0xff]
    %v79 = vld [vmem:[#allocation2 + $0x28] sm:$0xff]
    %v80 = vld [vmem:[#allocation2 + $0x30] sm:$0xff]
    %v81 = vld [vmem:[#allocation2 + $0x38] sm:$0xff]
    %v82 = vld [vmem:[#allocation2 + $0x40] sm:$0xff]
    %v83 = vld [vmem:[#allocation2 + $0x48] sm:$0xff]
    %v84 = vld [vmem:[#allocation2 + $0x50] sm:$0xff]
    %v85 = vld [vmem:[#allocation2 + $0x58] sm:$0xff]
    %v86 = vld [vmem:[#allocation2 + $0x60] sm:$0xff]
    %v87 = vld [vmem:[#allocation2 + $0x68] sm:$0xff]
    %v88 = vld [vmem:[#allocation2 + $0x70] sm:$0xff]
    %v89 = vld [vmem:[#allocation2 + $0x78] sm:$0xff]
    %v90 = vld [vmem:[#allocation2 + $0x80] sm:$0xff]
    %v91 = vld [vmem:[#allocation2 + $0x88] sm:$0xff]
    %v92 = vld [vmem:[#allocation2 + $0x90] sm:$0xff]
    %v93 = vld [vmem:[#allocation2 + $0x98] sm:$0xff]
    %v94 = vld [vmem:[#allocation2 + $0xa0] sm:$0xff]
    %v95 = vld [vmem:[#allocation2 + $0xa8] sm:$0xff]
    %v96 = vld [vmem:[#allocation2 + $0xb0] sm:$0xff]
    %v97 = vld [vmem:[#allocation2 + $0xb8] sm:$0xff]
    %v98 = vld [vmem:[#allocation2 + $0xc0] sm:$0xff]
    %v99 = vld [vmem:[#allocation2 + $0xc8] sm:$0xff]
    %v100 = vld [vmem:[#allocation2 + $0xd0] sm:$0xff]
    %v101 = vld [vmem:[#allocation2 + $0xd8] sm:$0xff]
    %v102 = vld [vmem:[#allocation2 + $0xe0] sm:$0xff]
    %v103 = vld [vmem:[#allocation2 + $0xe8] sm:$0xff]
    %v104 = vld [vmem:[#allocation2 + $0xf0] sm:$0xff]
    %v105 = vld [vmem:[#allocation2 + $0xf8] sm:$0xff]
    %v106 = vld [vmem:[#allocation2 + $0x100] sm:$0xff]
    %v107 = vld [vmem:[#allocation2 + $0x108] sm:$0xff]
    %v108 = vld [vmem:[#allocation2 + $0x110] sm:$0xff]
    %v109 = vld [vmem:[#allocation2 + $0x118] sm:$0xff]
    %v110 = vld [vmem:[#allocation2 + $0x120] sm:$0xff]
    %v111 = vld [vmem:[#allocation2 + $0x128] sm:$0xff]
    %v112 = vld [vmem:[#allocation2 + $0x130] sm:$0xff]
    %v113 = vld [vmem:[#allocation2 + $0x138] sm:$0xff]
    %v114 = vld [vmem:[#allocation2 + $0x140] sm:$0xff]
    %v115 = vld [vmem:[#allocation2 + $0x148] sm:$0xff]
    %v116 = vld [vmem:[#allocation2 + $0x150] sm:$0xff]
    %v117 = vld [vmem:[#allocation2 + $0x158] sm:$0xff]
    %v118 = vld [vmem:[#allocation2 + $0x160] sm:$0xff]
    %v119 = vld [vmem:[#allocation2 + $0x168] sm:$0xff]
    %v120 = vld [vmem:[#allocation2 + $0x170] sm:$0xff]
    %v121 = vld [vmem:[#allocation2 + $0x178] sm:$0xff]
    %v122 = vld [vmem:[#allocation2 + $0x180] sm:$0xff]
    %v123 = vld [vmem:[#allocation2 + $0x188] sm:$0xff]
    %v124 = vld [vmem:[#allocation2 + $0x190] sm:$0xff]
    %v125 = vld [vmem:[#allocation2 + $0x198] sm:$0xff]
    %v126 = vld [vmem:[#allocation2 + $0x1a0] sm:$0xff]
    %v127 = vld [vmem:[#allocation2 + $0x1a8] sm:$0xff]
    %v128 = vld [vmem:[#allocation2 + $0x1b0] sm:$0xff]
    %v129 = vld [vmem:[#allocation2 + $0x1b8] sm:$0xff]
    %v130 = vld [vmem:[#allocation2 + $0x1c0] sm:$0xff]
    %v131 = vld [vmem:[#allocation2 + $0x1c8] sm:$0xff]
    %v132 = vld [vmem:[#allocation2 + $0x1d0] sm:$0xff]
    %v133 = vld [vmem:[#allocation2 + $0x1d8] sm:$0xff]
    %v134 = vld [vmem:[#allocation2 + $0x1e0] sm:$0xff]
    %v135 = vld [vmem:[#allocation2 + $0x1e8] sm:$0xff]
    %v136 = vld [vmem:[#allocation2 + $0x1f0] sm:$0xff]
    %v137 = vld [vmem:[#allocation2 + $0x1f8] sm:$0xff]
    %v138 = vld [vmem:[#allocation2 + $0x200] sm:$0xff]
    %v139 = vld [vmem:[#allocation2 + $0x208] sm:$0xff]
    %v140 = vld [vmem:[#allocation2 + $0x210] sm:$0xff]
    %v141 = vld [vmem:[#allocation2 + $0x218] sm:$0xff]
    %v142 = vld [vmem:[#allocation2 + $0x220] sm:$0xff]
    %v143 = vld [vmem:[#allocation2 + $0x228] sm:$0xff]
    %v144 = vld [vmem:[#allocation2 + $0x230] sm:$0xff]
    %v145 = vld [vmem:[#allocation2 + $0x238] sm:$0xff]
    %v146 = vld [vmem:[#allocation2 + $0x240] sm:$0xff]
    %v147 = vld [vmem:[#allocation2 + $0x248] sm:$0xff]
    %v148 = vld [vmem:[#allocation2 + $0x250] sm:$0xff]
    %v149 = vld [vmem:[#allocation2 + $0x258] sm:$0xff]
    %v150 = vld [vmem:[#allocation2 + $0x260] sm:$0xff]
    %v151 = vld [vmem:[#allocation2 + $0x268] sm:$0xff]
    %v152 = vld [vmem:[#allocation2 + $0x270] sm:$0xff]
    %v153 = vld [vmem:[#allocation2 + $0x278] sm:$0xff]
    %v154 = vld [vmem:[#allocation2 + $0x280] sm:$0xff]
    %v155 = vld [vmem:[#allocation2 + $0x288] sm:$0xff]
    %v156 = vld [vmem:[#allocation2 + $0x290] sm:$0xff]
    %v157 = vld [vmem:[#allocation2 + $0x298] sm:$0xff]
    %v158 = vld [vmem:[#allocation2 + $0x2a0] sm:$0xff]
    %v159 = vld [vmem:[#allocation2 + $0x2a8] sm:$0xff]
    %v160 = vld [vmem:[#allocation2 + $0x2b0] sm:$0xff]
    %v161 = vld [vmem:[#allocation2 + $0x2b8] sm:$0xff]
    %v162 = vld [vmem:[#allocation2 + $0x2c0] sm:$0xff]
    %v163 = vld [vmem:[#allocation2 + $0x2c8] sm:$0xff]
    %v164 = vld [vmem:[#allocation2 + $0x2d0] sm:$0xff]
    %v165 = vld [vmem:[#allocation2 + $0x2d8] sm:$0xff]
    %v166 = vld [vmem:[#allocation2 + $0x2e0] sm:$0xff]
    %v167 = vld [vmem:[#allocation2 + $0x2e8] sm:$0xff]
    %v168 = vld [vmem:[#allocation2 + $0x2f0] sm:$0xff]
    %v169 = vld [vmem:[#allocation2 + $0x2f8] sm:$0xff]
    %v170 = vld [vmem:[#allocation2 + $0x300] sm:$0xff]
    %v171 = vld [vmem:[#allocation2 + $0x308] sm:$0xff]
    %v172 = vld [vmem:[#allocation2 + $0x310] sm:$0xff]
    %v173 = vld [vmem:[#allocation2 + $0x318] sm:$0xff]
    %v174 = vld [vmem:[#allocation2 + $0x320] sm:$0xff]
    %v175 = vld [vmem:[#allocation2 + $0x328] sm:$0xff]
    %v176 = vld [vmem:[#allocation2 + $0x330] sm:$0xff]
    %v177 = vld [vmem:[#allocation2 + $0x338] sm:$0xff]
    %v178 = vld [vmem:[#allocation2 + $0x340] sm:$0xff]
    %v179 = vld [vmem:[#allocation2 + $0x348] sm:$0xff]
    %v180 = vld [vmem:[#allocation2 + $0x350] sm:$0xff]
    %v181 = vld [vmem:[#allocation2 + $0x358] sm:$0xff]
    %v182 = vld [vmem:[#allocation2 + $0x360] sm:$0xff]
    %v183 = vld [vmem:[#allocation2 + $0x368] sm:$0xff]
    %v184 = vld [vmem:[#allocation2 + $0x370] sm:$0xff]
    %v185 = vld [vmem:[#allocation2 + $0x378] sm:$0xff]
    %v186 = vld [vmem:[#allocation2 + $0x380] sm:$0xff]
    %v187 = vld [vmem:[#allocation2 + $0x388] sm:$0xff]
    %v188 = vld [vmem:[#allocation2 + $0x390] sm:$0xff]
    %v189 = vld [vmem:[#allocation2 + $0x398] sm:$0xff]
    %v190 = vld [vmem:[#allocation2 + $0x3a0] sm:$0xff]
    %v191 = vld [vmem:[#allocation2 + $0x3a8] sm:$0xff]
    %v192 = vld [vmem:[#allocation2 + $0x3b0] sm:$0xff]
    %v193 = vld [vmem:[#allocation2 + $0x3b8] sm:$0xff]
    %v194 = vld [vmem:[#allocation2 + $0x3c0] sm:$0xff]
    %v195 = vld [vmem:[#allocation2 + $0x3c8] sm:$0xff]
    %v196 = vld [vmem:[#allocation2 + $0x3d0] sm:$0xff]
    %v197 = vld [vmem:[#allocation2 + $0x3d8] sm:$0xff]
    %v198 = vld [vmem:[#allocation2 + $0x3e0] sm:$0xff]
    %v199 = vld [vmem:[#allocation2 + $0x3e8] sm:$0xff]
    %v200 = vld [vmem:[#allocation2 + $0x3f0] sm:$0xff]
    %v201 = vld [vmem:[#allocation2 + $0x3f8] sm:$0xff]
    %v202 = vld [vmem:[#allocation2 + $0x400] sm:$0xff]
    %v203 = vld [vmem:[#allocation2 + $0x408] sm:$0xff]
    %v204 = vld [vmem:[#allocation2 + $0x410] sm:$0xff]
    %v205 = vld [vmem:[#allocation2 + $0x418] sm:$0xff]
    %v206 = vld [vmem:[#allocation2 + $0x420] sm:$0xff]
    %v207 = vld [vmem:[#allocation2 + $0x428] sm:$0xff]
    %v208 = vld [vmem:[#allocation2 + $0x430] sm:$0xff]
    %v209 = vld [vmem:[#allocation2 + $0x438] sm:$0xff]
    %v210 = vld [vmem:[#allocation2 + $0x440] sm:$0xff]
    %v211 = vld [vmem:[#allocation2 + $0x448] sm:$0xff]
    %v212 = vld [vmem:[#allocation2 + $0x450] sm:$0xff]
    %v213 = vld [vmem:[#allocation2 + $0x458] sm:$0xff]
    %v214 = vld [vmem:[#allocation2 + $0x460] sm:$0xff]
    %v215 = vld [vmem:[#allocation2 + $0x468] sm:$0xff]
    %v216 = vld [vmem:[#allocation2 + $0x470] sm:$0xff]
    %v217 = vld [vmem:[#allocation2 + $0x478] sm:$0xff]
    %v218 = vld [vmem:[#allocation2 + $0x480] sm:$0xff]
    %v219 = vld [vmem:[#allocation2 + $0x488] sm:$0xff]
    %v220 = vld [vmem:[#allocation2 + $0x490] sm:$0xff]
    %v221 = vld [vmem:[#allocation2 + $0x498] sm:$0xff]
    %v222 = vld [vmem:[#allocation2 + $0x4a0] sm:$0xff]
    %v223 = vld [vmem:[#allocation2 + $0x4a8] sm:$0xff]
    %v224 = vld [vmem:[#allocation2 + $0x4b0] sm:$0xff]
    %v225 = vld [vmem:[#allocation2 + $0x4b8] sm:$0xff]
    %v226 = vld [vmem:[#allocation2 + $0x4c0] sm:$0xff]
    %v227 = vld [vmem:[#allocation2 + $0x4c8] sm:$0xff]
    %v228 = vld [vmem:[#allocation2 + $0x4d0] sm:$0xff]
    %v229 = vld [vmem:[#allocation2 + $0x4d8] sm:$0xff]
    %v230 = vld [vmem:[#allocation2 + $0x4e0] sm:$0xff]
    %v231 = vld [vmem:[#allocation2 + $0x4e8] sm:$0xff]
    %v232 = vld [vmem:[#allocation2 + $0x4f0] sm:$0xff]
    %v233 = vld [vmem:[#allocation2 + $0x4f8] sm:$0xff]
    %v234 = vld [vmem:[#allocation2 + $0x500] sm:$0xff]
    %v235 = vld [vmem:[#allocation2 + $0x508] sm:$0xff]
    %v236 = vld [vmem:[#allocation2 + $0x510] sm:$0xff]
    %v237 = vld [vmem:[#allocation2 + $0x518] sm:$0xff]
    %v238 = vld [vmem:[#allocation2 + $0x520] sm:$0xff]
    %v239 = vld [vmem:[#allocation2 + $0x528] sm:$0xff]
    %v240 = vld [vmem:[#allocation2 + $0x530] sm:$0xff]
    %v241 = vld [vmem:[#allocation2 + $0x538] sm:$0xff]
    %v242 = vld [vmem:[#allocation2 + $0x540] sm:$0xff]
    %v243 = vld [vmem:[#allocation2 + $0x548] sm:$0xff]
    %v244 = vld [vmem:[#allocation2 + $0x550] sm:$0xff]
    %v245 = vld [vmem:[#allocation2 + $0x558] sm:$0xff]
    %v246 = vld [vmem:[#allocation2 + $0x560] sm:$0xff]
    %v247 = vld [vmem:[#allocation2 + $0x568] sm:$0xff]
    %v248 = vld [vmem:[#allocation2 + $0x570] sm:$0xff]
    %v249 = vld [vmem:[#allocation2 + $0x578] sm:$0xff]
    %v250 = vld [vmem:[#allocation2 + $0x580] sm:$0xff]
    %v251 = vld [vmem:[#allocation2 + $0x588] sm:$0xff]
    %v252 = vld [vmem:[#allocation2 + $0x590] sm:$0xff]
    %v253 = vld [vmem:[#allocation2 + $0x598] sm:$0xff]
    %v254 = vld [vmem:[#allocation2 + $0x5a0] sm:$0xff]
    %v255 = vld [vmem:[#allocation2 + $0x5a8] sm:$0xff]
    %v256 = vld [vmem:[#allocation2 + $0x5b0] sm:$0xff]
    %v257 = vld [vmem:[#allocation2 + $0x5b8] sm:$0xff]
    %v258 = vld [vmem:[#allocation2 + $0x5c0] sm:$0xff]
    %v259 = vld [vmem:[#allocation2 + $0x5c8] sm:$0xff]
    %v260 = vld [vmem:[#allocation2 + $0x5d0] sm:$0xff]
    %v261 = vld [vmem:[#allocation2 + $0x5d8] sm:$0xff]
    %v262 = vld [vmem:[#allocation2 + $0x5e0] sm:$0xff]
    %v263 = vld [vmem:[#allocation2 + $0x5e8] sm:$0xff]
    %v264 = vld [vmem:[#allocation2 + $0x5f0] sm:$0xff]
    %v265 = vld [vmem:[#allocation2 + $0x5f8] sm:$0xff]
    %v266 = vld [vmem:[#allocation2 + $0x600] sm:$0xff]
    %v267 = vld [vmem:[#allocation2 + $0x608] sm:$0xff]
    %v268 = vld [vmem:[#allocation2 + $0x610] sm:$0xff]
    %v269 = vld [vmem:[#allocation2 + $0x618] sm:$0xff]
    %v270 = vld [vmem:[#allocation2 + $0x620] sm:$0xff]
    %v271 = vld [vmem:[#allocation2 + $0x628] sm:$0xff]
    %v272 = vld [vmem:[#allocation2 + $0x630] sm:$0xff]
    %v273 = vld [vmem:[#allocation2 + $0x638] sm:$0xff]
    %v274 = vld [vmem:[#allocation2 + $0x640] sm:$0xff]
    %v275 = vld [vmem:[#allocation2 + $0x648] sm:$0xff]
    %v276 = vld [vmem:[#allocation2 + $0x650] sm:$0xff]
    %v277 = vld [vmem:[#allocation2 + $0x658] sm:$0xff]
    %v278 = vld [vmem:[#allocation2 + $0x660] sm:$0xff]
    %v279 = vld [vmem:[#allocation2 + $0x668] sm:$0xff]
    %v280 = vld [vmem:[#allocation2 + $0x670] sm:$0xff]
    %v281 = vld [vmem:[#allocation2 + $0x678] sm:$0xff]
    %v282 = vld [vmem:[#allocation2 + $0x680] sm:$0xff]
    %v283 = vld [vmem:[#allocation2 + $0x688] sm:$0xff]
    %v284 = vld [vmem:[#allocation2 + $0x690] sm:$0xff]
    %v285 = vld [vmem:[#allocation2 + $0x698] sm:$0xff]
    %v286 = vld [vmem:[#allocation2 + $0x6a0] sm:$0xff]
    %v287 = vld [vmem:[#allocation2 + $0x6a8] sm:$0xff]
    %v288 = vld [vmem:[#allocation2 + $0x6b0] sm:$0xff]
    %v289 = vld [vmem:[#allocation2 + $0x6b8] sm:$0xff]
    %v290 = vld [vmem:[#allocation2 + $0x6c0] sm:$0xff]
    %v291 = vld [vmem:[#allocation2 + $0x6c8] sm:$0xff]
    %v292 = vld [vmem:[#allocation2 + $0x6d0] sm:$0xff]
    %v293 = vld [vmem:[#allocation2 + $0x6d8] sm:$0xff]
    %v294 = vld [vmem:[#allocation2 + $0x6e0] sm:$0xff]
    %v295 = vld [vmem:[#allocation2 + $0x6e8] sm:$0xff]
    %v296 = vld [vmem:[#allocation2 + $0x6f0] sm:$0xff]
    %v297 = vld [vmem:[#allocation2 + $0x6f8] sm:$0xff]
    %v298 = vld [vmem:[#allocation2 + $0x700] sm:$0xff]
    %v299 = vld [vmem:[#allocation2 + $0x708] sm:$0xff]
    %v300 = vld [vmem:[#allocation2 + $0x710] sm:$0xff]
    %v301 = vld [vmem:[#allocation2 + $0x718] sm:$0xff]
    %v302 = vld [vmem:[#allocation2 + $0x720] sm:$0xff]
    %v303 = vld [vmem:[#allocation2 + $0x728] sm:$0xff]
    %v304 = vld [vmem:[#allocation2 + $0x730] sm:$0xff]
    %v305 = vld [vmem:[#allocation2 + $0x738] sm:$0xff]
    %v306 = vld [vmem:[#allocation2 + $0x740] sm:$0xff]
    %v307 = vld [vmem:[#allocation2 + $0x748] sm:$0xff]
    %v308 = vld [vmem:[#allocation2 + $0x750] sm:$0xff]
    %v309 = vld [vmem:[#allocation2 + $0x758] sm:$0xff]
    %v310 = vld [vmem:[#allocation2 + $0x760] sm:$0xff]
    %v311 = vld [vmem:[#allocation2 + $0x768] sm:$0xff]
    %v312 = vld [vmem:[#allocation2 + $0x770] sm:$0xff]
    %v313 = vld [vmem:[#allocation2 + $0x778] sm:$0xff]
    %v314 = vld [vmem:[#allocation2 + $0x780] sm:$0xff]
    %v315 = vld [vmem:[#allocation2 + $0x788] sm:$0xff]
    %v316 = vld [vmem:[#allocation2 + $0x790] sm:$0xff]
    %v317 = vld [vmem:[#allocation2 + $0x798] sm:$0xff]
    %v318 = vld [vmem:[#allocation2 + $0x7a0] sm:$0xff]
    %v319 = vld [vmem:[#allocation2 + $0x7a8] sm:$0xff]
    %v320 = vld [vmem:[#allocation2 + $0x7b0] sm:$0xff]
    %v321 = vld [vmem:[#allocation2 + $0x7b8] sm:$0xff]
    %v322 = vld [vmem:[#allocation2 + $0x7c0] sm:$0xff]
    %v323 = vld [vmem:[#allocation2 + $0x7c8] sm:$0xff]
    %v324 = vld [vmem:[#allocation2 + $0x7d0] sm:$0xff]
    %v325 = vld [vmem:[#allocation2 + $0x7d8] sm:$0xff]
    %v326 = vld [vmem:[#allocation2 + $0x7e0] sm:$0xff]
    %v327 = vld [vmem:[#allocation2 + $0x7e8] sm:$0xff]
    %v328 = vld [vmem:[#allocation2 + $0x7f0] sm:$0xff]
    %v329 = vld [vmem:[#allocation2 + $0x7f8] sm:$0xff]
    %v330 = vld [vmem:[#allocation2 + $0x800] sm:$0xff]
    %v331 = vld [vmem:[#allocation2 + $0x808] sm:$0xff]
    %v332 = vld [vmem:[#allocation2 + $0x810] sm:$0xff]
    %v333 = vld [vmem:[#allocation2 + $0x818] sm:$0xff]
    %v334 = vld [vmem:[#allocation2 + $0x820] sm:$0xff]
    %v335 = vld [vmem:[#allocation2 + $0x828] sm:$0xff]
    %v336 = vld [vmem:[#allocation2 + $0x830] sm:$0xff]
    %v337 = vld [vmem:[#allocation2 + $0x838] sm:$0xff]
    %v338 = vld [vmem:[#allocation2 + $0x840] sm:$0xff]
    %v339 = vld [vmem:[#allocation2 + $0x848] sm:$0xff]
    %v340 = vld [vmem:[#allocation2 + $0x850] sm:$0xff]
    %v341 = vld [vmem:[#allocation2 + $0x858] sm:$0xff]
    %v342 = vld [vmem:[#allocation2 + $0x860] sm:$0xff]
    %v343 = vld [vmem:[#allocation2 + $0x868] sm:$0xff]
    %v344 = vld [vmem:[#allocation2 + $0x870] sm:$0xff]
    %v345 = vld [vmem:[#allocation2 + $0x878] sm:$0xff]
    %v346 = vld [vmem:[#allocation2 + $0x880] sm:$0xff]
    %v347 = vld [vmem:[#allocation2 + $0x888] sm:$0xff]
    %v348 = vld [vmem:[#allocation2 + $0x890] sm:$0xff]
    %v349 = vld [vmem:[#allocation2 + $0x898] sm:$0xff]
    %v350 = vld [vmem:[#allocation2 + $0x8a0] sm:$0xff]
    %v351 = vld [vmem:[#allocation2 + $0x8a8] sm:$0xff]
    %v352 = vld [vmem:[#allocation2 + $0x8b0] sm:$0xff]
    %v353 = vld [vmem:[#allocation2 + $0x8b8] sm:$0xff]
    %v354 = vld [vmem:[#allocation2 + $0x8c0] sm:$0xff]
    %v355 = vld [vmem:[#allocation2 + $0x8c8] sm:$0xff]
    %v356 = vld [vmem:[#allocation2 + $0x8d0] sm:$0xff]
    %v357 = vld [vmem:[#allocation2 + $0x8d8] sm:$0xff]
    %v358 = vld [vmem:[#allocation2 + $0x8e0] sm:$0xff]
    %v359 = vld [vmem:[#allocation2 + $0x8e8] sm:$0xff]
    %v360 = vld [vmem:[#allocation2 + $0x8f0] sm:$0xff]
    %v361 = vld [vmem:[#allocation2 + $0x8f8] sm:$0xff]
    %v362 = vld [vmem:[#allocation4] sm:$0x3f]
    %v364 = vlaneseq
    %v365 = vshrl.u32 %v364, 7
    %v366 = vsub.s32 0, %v365
    %v367 = vrot.slane %v362, %v366
    %v368 = vlaneseq
    %v369 = vshrl.u32 %v368, 7
    %v370 = vsub.s32 1, %v369
    %v371 = vrot.slane %v362, %v370
    %v372 = vlaneseq
    %v373 = vshrl.u32 %v372, 7
    %v374 = vsub.s32 2, %v373
    %v375 = vrot.slane %v362, %v374
    %v376 = vlaneseq
    %v377 = vshrl.u32 %v376, 7
    %v378 = vsub.s32 3, %v377
    %v379 = vrot.slane %v362, %v378
    %v380 = vlaneseq
    %v381 = vshrl.u32 %v380, 7
    %v382 = vsub.s32 4, %v381
    %v383 = vrot.slane %v362, %v382
    %v384 = vlaneseq
    %v385 = vshrl.u32 %v384, 7
    %v386 = vsub.s32 5, %v385
    %v387 = vrot.slane %v362, %v386
    %v397 = vunpack.c.l.b16 %v71
    %v398 = vunpack.c.h.b16 %v71
    %v399 = vunpack.c.l.b16 %v72
    %v400 = vunpack.c.h.b16 %v72
    %v401 = vunpack.c.l.b16 %v73
    %v402 = vunpack.c.h.b16 %v73
    %v403 = vpack.c.b16 %v397, %v397
    %v404 = vpack.c.b16 %v398, %v398
    %v405 = vpack.c.b16 %v399, %v399
    %v406 = vpack.c.b16 %v400, %v400
    %v407 = vpack.c.b16 %v401, %v401
    %v408 = vpack.c.b16 %v402, %v402
    %v703 = vunpack.c.l.b16 %v74
    %v704 = vunpack.c.h.b16 %v74
    %v705 = vunpack.c.l.b16 %v75
    %v706 = vunpack.c.h.b16 %v75
    %v707 = vunpack.c.l.b16 %v76
    %v708 = vunpack.c.h.b16 %v76
    %v709 = vunpack.c.l.b16 %v77
    %v710 = vunpack.c.h.b16 %v77
    %v711 = vunpack.c.l.b16 %v78
    %v712 = vunpack.c.h.b16 %v78
    %v713 = vunpack.c.l.b16 %v79
    %v714 = vunpack.c.h.b16 %v79
    %v715 = vunpack.c.l.b16 %v80
    %v716 = vunpack.c.h.b16 %v80
    %v717 = vunpack.c.l.b16 %v81
    %v718 = vunpack.c.h.b16 %v81
    %v719 = vunpack.c.l.b16 %v82
    %v720 = vunpack.c.h.b16 %v82
    %v721 = vunpack.c.l.b16 %v83
    %v722 = vunpack.c.h.b16 %v83
    %v723 = vunpack.c.l.b16 %v84
    %v724 = vunpack.c.h.b16 %v84
    %v725 = vunpack.c.l.b16 %v85
    %v726 = vunpack.c.h.b16 %v85
    %v727 = vunpack.c.l.b16 %v86
    %v728 = vunpack.c.h.b16 %v86
    %v729 = vunpack.c.l.b16 %v87
    %v730 = vunpack.c.h.b16 %v87
    %v731 = vunpack.c.l.b16 %v88
    %v732 = vunpack.c.h.b16 %v88
    %v733 = vunpack.c.l.b16 %v89
    %v734 = vunpack.c.h.b16 %v89
    %v735 = vunpack.c.l.b16 %v90
    %v736 = vunpack.c.h.b16 %v90
    %v737 = vunpack.c.l.b16 %v91
    %v738 = vunpack.c.h.b16 %v91
    %v739 = vunpack.c.l.b16 %v92
    %v740 = vunpack.c.h.b16 %v92
    %v741 = vunpack.c.l.b16 %v93
    %v742 = vunpack.c.h.b16 %v93
    %v743 = vunpack.c.l.b16 %v94
    %v744 = vunpack.c.h.b16 %v94
    %v745 = vunpack.c.l.b16 %v95
    %v746 = vunpack.c.h.b16 %v95
    %v747 = vunpack.c.l.b16 %v96
    %v748 = vunpack.c.h.b16 %v96
    %v749 = vunpack.c.l.b16 %v97
    %v750 = vunpack.c.h.b16 %v97
    %v751 = vunpack.c.l.b16 %v98
    %v752 = vunpack.c.h.b16 %v98
    %v753 = vunpack.c.l.b16 %v99
    %v754 = vunpack.c.h.b16 %v99
    %v755 = vunpack.c.l.b16 %v100
    %v756 = vunpack.c.h.b16 %v100
    %v757 = vunpack.c.l.b16 %v101
    %v758 = vunpack.c.h.b16 %v101
    %v759 = vunpack.c.l.b16 %v102
    %v760 = vunpack.c.h.b16 %v102
    %v761 = vunpack.c.l.b16 %v103
    %v762 = vunpack.c.h.b16 %v103
    %v763 = vunpack.c.l.b16 %v104
    %v764 = vunpack.c.h.b16 %v104
    %v765 = vunpack.c.l.b16 %v105
    %v766 = vunpack.c.h.b16 %v105
    %v767 = vunpack.c.l.b16 %v106
    %v768 = vunpack.c.h.b16 %v106
    %v769 = vunpack.c.l.b16 %v107
    %v770 = vunpack.c.h.b16 %v107
    %v771 = vunpack.c.l.b16 %v108
    %v772 = vunpack.c.h.b16 %v108
    %v773 = vunpack.c.l.b16 %v109
    %v774 = vunpack.c.h.b16 %v109
    %v775 = vunpack.c.l.b16 %v110
    %v776 = vunpack.c.h.b16 %v110
    %v777 = vunpack.c.l.b16 %v111
    %v778 = vunpack.c.h.b16 %v111
    %v779 = vunpack.c.l.b16 %v112
    %v780 = vunpack.c.h.b16 %v112
    %v781 = vunpack.c.l.b16 %v113
    %v782 = vunpack.c.h.b16 %v113
    %v783 = vunpack.c.l.b16 %v114
    %v784 = vunpack.c.h.b16 %v114
    %v785 = vunpack.c.l.b16 %v115
    %v786 = vunpack.c.h.b16 %v115
    %v787 = vunpack.c.l.b16 %v116
    %v788 = vunpack.c.h.b16 %v116
    %v789 = vunpack.c.l.b16 %v117
    %v790 = vunpack.c.h.b16 %v117
    %v791 = vunpack.c.l.b16 %v118
    %v792 = vunpack.c.h.b16 %v118
    %v793 = vunpack.c.l.b16 %v119
    %v794 = vunpack.c.h.b16 %v119
    %v795 = vunpack.c.l.b16 %v120
    %v796 = vunpack.c.h.b16 %v120
    %v797 = vunpack.c.l.b16 %v121
    %v798 = vunpack.c.h.b16 %v121
    %v799 = vunpack.c.l.b16 %v122
    %v800 = vunpack.c.h.b16 %v122
    %v801 = vunpack.c.l.b16 %v123
    %v802 = vunpack.c.h.b16 %v123
    %v803 = vunpack.c.l.b16 %v124
    %v804 = vunpack.c.h.b16 %v124
    %v805 = vunpack.c.l.b16 %v125
    %v806 = vunpack.c.h.b16 %v125
    %v807 = vunpack.c.l.b16 %v126
    %v808 = vunpack.c.h.b16 %v126
    %v809 = vunpack.c.l.b16 %v127
    %v810 = vunpack.c.h.b16 %v127
    %v811 = vunpack.c.l.b16 %v128
    %v812 = vunpack.c.h.b16 %v128
    %v813 = vunpack.c.l.b16 %v129
    %v814 = vunpack.c.h.b16 %v129
    %v815 = vunpack.c.l.b16 %v130
    %v816 = vunpack.c.h.b16 %v130
    %v817 = vunpack.c.l.b16 %v131
    %v818 = vunpack.c.h.b16 %v131
    %v819 = vunpack.c.l.b16 %v132
    %v820 = vunpack.c.h.b16 %v132
    %v821 = vunpack.c.l.b16 %v133
    %v822 = vunpack.c.h.b16 %v133
    %v823 = vunpack.c.l.b16 %v134
    %v824 = vunpack.c.h.b16 %v134
    %v825 = vunpack.c.l.b16 %v135
    %v826 = vunpack.c.h.b16 %v135
    %v827 = vunpack.c.l.b16 %v136
    %v828 = vunpack.c.h.b16 %v136
    %v829 = vunpack.c.l.b16 %v137
    %v830 = vunpack.c.h.b16 %v137
    %v831 = vunpack.c.l.b16 %v138
    %v832 = vunpack.c.h.b16 %v138
    %v833 = vunpack.c.l.b16 %v139
    %v834 = vunpack.c.h.b16 %v139
    %v835 = vunpack.c.l.b16 %v140
    %v836 = vunpack.c.h.b16 %v140
    %v837 = vunpack.c.l.b16 %v141
    %v838 = vunpack.c.h.b16 %v141
    %v839 = vunpack.c.l.b16 %v142
    %v840 = vunpack.c.h.b16 %v142
    %v841 = vunpack.c.l.b16 %v143
    %v842 = vunpack.c.h.b16 %v143
    %v843 = vunpack.c.l.b16 %v144
    %v844 = vunpack.c.h.b16 %v144
    %v845 = vunpack.c.l.b16 %v145
    %v846 = vunpack.c.h.b16 %v145
    %v847 = vunpack.c.l.b16 %v146
    %v848 = vunpack.c.h.b16 %v146
    %v849 = vunpack.c.l.b16 %v147
    %v850 = vunpack.c.h.b16 %v147
    %v851 = vunpack.c.l.b16 %v148
    %v852 = vunpack.c.h.b16 %v148
    %v853 = vunpack.c.l.b16 %v149
    %v854 = vunpack.c.h.b16 %v149
    %v855 = vunpack.c.l.b16 %v150
    %v856 = vunpack.c.h.b16 %v150
    %v857 = vunpack.c.l.b16 %v151
    %v858 = vunpack.c.h.b16 %v151
    %v859 = vunpack.c.l.b16 %v152
    %v860 = vunpack.c.h.b16 %v152
    %v861 = vunpack.c.l.b16 %v153
    %v862 = vunpack.c.h.b16 %v153
    %v863 = vunpack.c.l.b16 %v154
    %v864 = vunpack.c.h.b16 %v154
    %v865 = vunpack.c.l.b16 %v155
    %v866 = vunpack.c.h.b16 %v155
    %v867 = vunpack.c.l.b16 %v156
    %v868 = vunpack.c.h.b16 %v156
    %v869 = vunpack.c.l.b16 %v157
    %v870 = vunpack.c.h.b16 %v157
    %v871 = vunpack.c.l.b16 %v158
    %v872 = vunpack.c.h.b16 %v158
    %v873 = vunpack.c.l.b16 %v159
    %v874 = vunpack.c.h.b16 %v159
    %v875 = vunpack.c.l.b16 %v160
    %v876 = vunpack.c.h.b16 %v160
    %v877 = vunpack.c.l.b16 %v161
    %v878 = vunpack.c.h.b16 %v161
    %v879 = vunpack.c.l.b16 %v162
    %v880 = vunpack.c.h.b16 %v162
    %v881 = vunpack.c.l.b16 %v163
    %v882 = vunpack.c.h.b16 %v163
    %v883 = vunpack.c.l.b16 %v164
    %v884 = vunpack.c.h.b16 %v164
    %v885 = vunpack.c.l.b16 %v165
    %v886 = vunpack.c.h.b16 %v165
    %v887 = vunpack.c.l.b16 %v166
    %v888 = vunpack.c.h.b16 %v166
    %v889 = vunpack.c.l.b16 %v167
    %v890 = vunpack.c.h.b16 %v167
    %v891 = vunpack.c.l.b16 %v168
    %v892 = vunpack.c.h.b16 %v168
    %v893 = vunpack.c.l.b16 %v169
    %v894 = vunpack.c.h.b16 %v169
    %v895 = vunpack.c.l.b16 %v170
    %v896 = vunpack.c.h.b16 %v170
    %v897 = vunpack.c.l.b16 %v171
    %v898 = vunpack.c.h.b16 %v171
    %v899 = vunpack.c.l.b16 %v172
    %v900 = vunpack.c.h.b16 %v172
    %v901 = vunpack.c.l.b16 %v173
    %v902 = vunpack.c.h.b16 %v173
    %v903 = vunpack.c.l.b16 %v174
    %v904 = vunpack.c.h.b16 %v174
    %v905 = vunpack.c.l.b16 %v175
    %v906 = vunpack.c.h.b16 %v175
    %v907 = vunpack.c.l.b16 %v176
    %v908 = vunpack.c.h.b16 %v176
    %v909 = vunpack.c.l.b16 %v177
    %v910 = vunpack.c.h.b16 %v177
    %v911 = vunpack.c.l.b16 %v178
    %v912 = vunpack.c.h.b16 %v178
    %v913 = vunpack.c.l.b16 %v179
    %v914 = vunpack.c.h.b16 %v179
    %v915 = vunpack.c.l.b16 %v180
    %v916 = vunpack.c.h.b16 %v180
    %v917 = vunpack.c.l.b16 %v181
    %v918 = vunpack.c.h.b16 %v181
    %v919 = vunpack.c.l.b16 %v182
    %v920 = vunpack.c.h.b16 %v182
    %v921 = vunpack.c.l.b16 %v183
    %v922 = vunpack.c.h.b16 %v183
    %v923 = vunpack.c.l.b16 %v184
    %v924 = vunpack.c.h.b16 %v184
    %v925 = vunpack.c.l.b16 %v185
    %v926 = vunpack.c.h.b16 %v185
    %v927 = vunpack.c.l.b16 %v186
    %v928 = vunpack.c.h.b16 %v186
    %v929 = vunpack.c.l.b16 %v187
    %v930 = vunpack.c.h.b16 %v187
    %v931 = vunpack.c.l.b16 %v188
    %v932 = vunpack.c.h.b16 %v188
    %v933 = vunpack.c.l.b16 %v189
    %v934 = vunpack.c.h.b16 %v189
    %v935 = vunpack.c.l.b16 %v190
    %v936 = vunpack.c.h.b16 %v190
    %v937 = vunpack.c.l.b16 %v191
    %v938 = vunpack.c.h.b16 %v191
    %v939 = vunpack.c.l.b16 %v192
    %v940 = vunpack.c.h.b16 %v192
    %v941 = vunpack.c.l.b16 %v193
    %v942 = vunpack.c.h.b16 %v193
    %v943 = vunpack.c.l.b16 %v194
    %v944 = vunpack.c.h.b16 %v194
    %v945 = vunpack.c.l.b16 %v195
    %v946 = vunpack.c.h.b16 %v195
    %v947 = vunpack.c.l.b16 %v196
    %v948 = vunpack.c.h.b16 %v196
    %v949 = vunpack.c.l.b16 %v197
    %v950 = vunpack.c.h.b16 %v197
    %v951 = vunpack.c.l.b16 %v198
    %v952 = vunpack.c.h.b16 %v198
    %v953 = vunpack.c.l.b16 %v199
    %v954 = vunpack.c.h.b16 %v199
    %v955 = vunpack.c.l.b16 %v200
    %v956 = vunpack.c.h.b16 %v200
    %v957 = vunpack.c.l.b16 %v201
    %v958 = vunpack.c.h.b16 %v201
    %v959 = vunpack.c.l.b16 %v202
    %v960 = vunpack.c.h.b16 %v202
    %v961 = vunpack.c.l.b16 %v203
    %v962 = vunpack.c.h.b16 %v203
    %v963 = vunpack.c.l.b16 %v204
    %v964 = vunpack.c.h.b16 %v204
    %v965 = vunpack.c.l.b16 %v205
    %v966 = vunpack.c.h.b16 %v205
    %v967 = vunpack.c.l.b16 %v206
    %v968 = vunpack.c.h.b16 %v206
    %v969 = vunpack.c.l.b16 %v207
    %v970 = vunpack.c.h.b16 %v207
    %v971 = vunpack.c.l.b16 %v208
    %v972 = vunpack.c.h.b16 %v208
    %v973 = vunpack.c.l.b16 %v209
    %v974 = vunpack.c.h.b16 %v209
    %v975 = vunpack.c.l.b16 %v210
    %v976 = vunpack.c.h.b16 %v210
    %v977 = vunpack.c.l.b16 %v211
    %v978 = vunpack.c.h.b16 %v211
    %v979 = vunpack.c.l.b16 %v212
    %v980 = vunpack.c.h.b16 %v212
    %v981 = vunpack.c.l.b16 %v213
    %v982 = vunpack.c.h.b16 %v213
    %v983 = vunpack.c.l.b16 %v214
    %v984 = vunpack.c.h.b16 %v214
    %v985 = vunpack.c.l.b16 %v215
    %v986 = vunpack.c.h.b16 %v215
    %v987 = vunpack.c.l.b16 %v216
    %v988 = vunpack.c.h.b16 %v216
    %v989 = vunpack.c.l.b16 %v217
    %v990 = vunpack.c.h.b16 %v217
    %v991 = vunpack.c.l.b16 %v218
    %v992 = vunpack.c.h.b16 %v218
    %v993 = vunpack.c.l.b16 %v219
    %v994 = vunpack.c.h.b16 %v219
    %v995 = vunpack.c.l.b16 %v220
    %v996 = vunpack.c.h.b16 %v220
    %v997 = vunpack.c.l.b16 %v221
    %v998 = vunpack.c.h.b16 %v221
    %v999 = vunpack.c.l.b16 %v222
    %v1000 = vunpack.c.h.b16 %v222
    %v1001 = vunpack.c.l.b16 %v223
    %v1002 = vunpack.c.h.b16 %v223
    %v1003 = vunpack.c.l.b16 %v224
    %v1004 = vunpack.c.h.b16 %v224
    %v1005 = vunpack.c.l.b16 %v225
    %v1006 = vunpack.c.h.b16 %v225
    %v1007 = vunpack.c.l.b16 %v226
    %v1008 = vunpack.c.h.b16 %v226
    %v1009 = vunpack.c.l.b16 %v227
    %v1010 = vunpack.c.h.b16 %v227
    %v1011 = vunpack.c.l.b16 %v228
    %v1012 = vunpack.c.h.b16 %v228
    %v1013 = vunpack.c.l.b16 %v229
    %v1014 = vunpack.c.h.b16 %v229
    %v1015 = vunpack.c.l.b16 %v230
    %v1016 = vunpack.c.h.b16 %v230
    %v1017 = vunpack.c.l.b16 %v231
    %v1018 = vunpack.c.h.b16 %v231
    %v1019 = vunpack.c.l.b16 %v232
    %v1020 = vunpack.c.h.b16 %v232
    %v1021 = vunpack.c.l.b16 %v233
    %v1022 = vunpack.c.h.b16 %v233
    %v1023 = vunpack.c.l.b16 %v234
    %v1024 = vunpack.c.h.b16 %v234
    %v1025 = vunpack.c.l.b16 %v235
    %v1026 = vunpack.c.h.b16 %v235
    %v1027 = vunpack.c.l.b16 %v236
    %v1028 = vunpack.c.h.b16 %v236
    %v1029 = vunpack.c.l.b16 %v237
    %v1030 = vunpack.c.h.b16 %v237
    %v1031 = vunpack.c.l.b16 %v238
    %v1032 = vunpack.c.h.b16 %v238
    %v1033 = vunpack.c.l.b16 %v239
    %v1034 = vunpack.c.h.b16 %v239
    %v1035 = vunpack.c.l.b16 %v240
    %v1036 = vunpack.c.h.b16 %v240
    %v1037 = vunpack.c.l.b16 %v241
    %v1038 = vunpack.c.h.b16 %v241
    %v1039 = vunpack.c.l.b16 %v242
    %v1040 = vunpack.c.h.b16 %v242
    %v1041 = vunpack.c.l.b16 %v243
    %v1042 = vunpack.c.h.b16 %v243
    %v1043 = vunpack.c.l.b16 %v244
    %v1044 = vunpack.c.h.b16 %v244
    %v1045 = vunpack.c.l.b16 %v245
    %v1046 = vunpack.c.h.b16 %v245
    %v1047 = vunpack.c.l.b16 %v246
    %v1048 = vunpack.c.h.b16 %v246
    %v1049 = vunpack.c.l.b16 %v247
    %v1050 = vunpack.c.h.b16 %v247
    %v1051 = vunpack.c.l.b16 %v248
    %v1052 = vunpack.c.h.b16 %v248
    %v1053 = vunpack.c.l.b16 %v249
    %v1054 = vunpack.c.h.b16 %v249
    %v1055 = vunpack.c.l.b16 %v250
    %v1056 = vunpack.c.h.b16 %v250
    %v1057 = vunpack.c.l.b16 %v251
    %v1058 = vunpack.c.h.b16 %v251
    %v1059 = vunpack.c.l.b16 %v252
    %v1060 = vunpack.c.h.b16 %v252
    %v1061 = vunpack.c.l.b16 %v253
    %v1062 = vunpack.c.h.b16 %v253
    %v1063 = vunpack.c.l.b16 %v254
    %v1064 = vunpack.c.h.b16 %v254
    %v1065 = vunpack.c.l.b16 %v255
    %v1066 = vunpack.c.h.b16 %v255
    %v1067 = vunpack.c.l.b16 %v256
    %v1068 = vunpack.c.h.b16 %v256
    %v1069 = vunpack.c.l.b16 %v257
    %v1070 = vunpack.c.h.b16 %v257
    %v1071 = vunpack.c.l.b16 %v258
    %v1072 = vunpack.c.h.b16 %v258
    %v1073 = vunpack.c.l.b16 %v259
    %v1074 = vunpack.c.h.b16 %v259
    %v1075 = vunpack.c.l.b16 %v260
    %v1076 = vunpack.c.h.b16 %v260
    %v1077 = vunpack.c.l.b16 %v261
    %v1078 = vunpack.c.h.b16 %v261
    %v1079 = vunpack.c.l.b16 %v262
    %v1080 = vunpack.c.h.b16 %v262
    %v1081 = vunpack.c.l.b16 %v263
    %v1082 = vunpack.c.h.b16 %v263
    %v1083 = vunpack.c.l.b16 %v264
    %v1084 = vunpack.c.h.b16 %v264
    %v1085 = vunpack.c.l.b16 %v265
    %v1086 = vunpack.c.h.b16 %v265
    %v1087 = vunpack.c.l.b16 %v266
    %v1088 = vunpack.c.h.b16 %v266
    %v1089 = vunpack.c.l.b16 %v267
    %v1090 = vunpack.c.h.b16 %v267
    %v1091 = vunpack.c.l.b16 %v268
    %v1092 = vunpack.c.h.b16 %v268
    %v1093 = vunpack.c.l.b16 %v269
    %v1094 = vunpack.c.h.b16 %v269
    %v1095 = vunpack.c.l.b16 %v270
    %v1096 = vunpack.c.h.b16 %v270
    %v1097 = vunpack.c.l.b16 %v271
    %v1098 = vunpack.c.h.b16 %v271
    %v1099 = vunpack.c.l.b16 %v272
    %v1100 = vunpack.c.h.b16 %v272
    %v1101 = vunpack.c.l.b16 %v273
    %v1102 = vunpack.c.h.b16 %v273
    %v1103 = vunpack.c.l.b16 %v274
    %v1104 = vunpack.c.h.b16 %v274
    %v1105 = vunpack.c.l.b16 %v275
    %v1106 = vunpack.c.h.b16 %v275
    %v1107 = vunpack.c.l.b16 %v276
    %v1108 = vunpack.c.h.b16 %v276
    %v1109 = vunpack.c.l.b16 %v277
    %v1110 = vunpack.c.h.b16 %v277
    %v1111 = vunpack.c.l.b16 %v278
    %v1112 = vunpack.c.h.b16 %v278
    %v1113 = vunpack.c.l.b16 %v279
    %v1114 = vunpack.c.h.b16 %v279
    %v1115 = vunpack.c.l.b16 %v280
    %v1116 = vunpack.c.h.b16 %v280
    %v1117 = vunpack.c.l.b16 %v281
    %v1118 = vunpack.c.h.b16 %v281
    %v1119 = vunpack.c.l.b16 %v282
    %v1120 = vunpack.c.h.b16 %v282
    %v1121 = vunpack.c.l.b16 %v283
    %v1122 = vunpack.c.h.b16 %v283
    %v1123 = vunpack.c.l.b16 %v284
    %v1124 = vunpack.c.h.b16 %v284
    %v1125 = vunpack.c.l.b16 %v285
    %v1126 = vunpack.c.h.b16 %v285
    %v1127 = vunpack.c.l.b16 %v286
    %v1128 = vunpack.c.h.b16 %v286
    %v1129 = vunpack.c.l.b16 %v287
    %v1130 = vunpack.c.h.b16 %v287
    %v1131 = vunpack.c.l.b16 %v288
    %v1132 = vunpack.c.h.b16 %v288
    %v1133 = vunpack.c.l.b16 %v289
    %v1134 = vunpack.c.h.b16 %v289
    %v1135 = vunpack.c.l.b16 %v290
    %v1136 = vunpack.c.h.b16 %v290
    %v1137 = vunpack.c.l.b16 %v291
    %v1138 = vunpack.c.h.b16 %v291
    %v1139 = vunpack.c.l.b16 %v292
    %v1140 = vunpack.c.h.b16 %v292
    %v1141 = vunpack.c.l.b16 %v293
    %v1142 = vunpack.c.h.b16 %v293
    %v1143 = vunpack.c.l.b16 %v294
    %v1144 = vunpack.c.h.b16 %v294
    %v1145 = vunpack.c.l.b16 %v295
    %v1146 = vunpack.c.h.b16 %v295
    %v1147 = vunpack.c.l.b16 %v296
    %v1148 = vunpack.c.h.b16 %v296
    %v1149 = vunpack.c.l.b16 %v297
    %v1150 = vunpack.c.h.b16 %v297
    %v1151 = vunpack.c.l.b16 %v298
    %v1152 = vunpack.c.h.b16 %v298
    %v1153 = vunpack.c.l.b16 %v299
    %v1154 = vunpack.c.h.b16 %v299
    %v1155 = vunpack.c.l.b16 %v300
    %v1156 = vunpack.c.h.b16 %v300
    %v1157 = vunpack.c.l.b16 %v301
    %v1158 = vunpack.c.h.b16 %v301
    %v1159 = vunpack.c.l.b16 %v302
    %v1160 = vunpack.c.h.b16 %v302
    %v1161 = vunpack.c.l.b16 %v303
    %v1162 = vunpack.c.h.b16 %v303
    %v1163 = vunpack.c.l.b16 %v304
    %v1164 = vunpack.c.h.b16 %v304
    %v1165 = vunpack.c.l.b16 %v305
    %v1166 = vunpack.c.h.b16 %v305
    %v1167 = vunpack.c.l.b16 %v306
    %v1168 = vunpack.c.h.b16 %v306
    %v1169 = vunpack.c.l.b16 %v307
    %v1170 = vunpack.c.h.b16 %v307
    %v1171 = vunpack.c.l.b16 %v308
    %v1172 = vunpack.c.h.b16 %v308
    %v1173 = vunpack.c.l.b16 %v309
    %v1174 = vunpack.c.h.b16 %v309
    %v1175 = vunpack.c.l.b16 %v310
    %v1176 = vunpack.c.h.b16 %v310
    %v1177 = vunpack.c.l.b16 %v311
    %v1178 = vunpack.c.h.b16 %v311
    %v1179 = vunpack.c.l.b16 %v312
    %v1180 = vunpack.c.h.b16 %v312
    %v1181 = vunpack.c.l.b16 %v313
    %v1182 = vunpack.c.h.b16 %v313
    %v1183 = vunpack.c.l.b16 %v314
    %v1184 = vunpack.c.h.b16 %v314
    %v1185 = vunpack.c.l.b16 %v315
    %v1186 = vunpack.c.h.b16 %v315
    %v1187 = vunpack.c.l.b16 %v316
    %v1188 = vunpack.c.h.b16 %v316
    %v1189 = vunpack.c.l.b16 %v317
    %v1190 = vunpack.c.h.b16 %v317
    %v1191 = vunpack.c.l.b16 %v318
    %v1192 = vunpack.c.h.b16 %v318
    %v1193 = vunpack.c.l.b16 %v319
    %v1194 = vunpack.c.h.b16 %v319
    %v1195 = vunpack.c.l.b16 %v320
    %v1196 = vunpack.c.h.b16 %v320
    %v1197 = vunpack.c.l.b16 %v321
    %v1198 = vunpack.c.h.b16 %v321
    %v1199 = vunpack.c.l.b16 %v322
    %v1200 = vunpack.c.h.b16 %v322
    %v1201 = vunpack.c.l.b16 %v323
    %v1202 = vunpack.c.h.b16 %v323
    %v1203 = vunpack.c.l.b16 %v324
    %v1204 = vunpack.c.h.b16 %v324
    %v1205 = vunpack.c.l.b16 %v325
    %v1206 = vunpack.c.h.b16 %v325
    %v1207 = vunpack.c.l.b16 %v326
    %v1208 = vunpack.c.h.b16 %v326
    %v1209 = vunpack.c.l.b16 %v327
    %v1210 = vunpack.c.h.b16 %v327
    %v1211 = vunpack.c.l.b16 %v328
    %v1212 = vunpack.c.h.b16 %v328
    %v1213 = vunpack.c.l.b16 %v329
    %v1214 = vunpack.c.h.b16 %v329
    %v1215 = vunpack.c.l.b16 %v330
    %v1216 = vunpack.c.h.b16 %v330
    %v1217 = vunpack.c.l.b16 %v331
    %v1218 = vunpack.c.h.b16 %v331
    %v1219 = vunpack.c.l.b16 %v332
    %v1220 = vunpack.c.h.b16 %v332
    %v1221 = vunpack.c.l.b16 %v333
    %v1222 = vunpack.c.h.b16 %v333
    %v1223 = vunpack.c.l.b16 %v334
    %v1224 = vunpack.c.h.b16 %v334
    %v1225 = vunpack.c.l.b16 %v335
    %v1226 = vunpack.c.h.b16 %v335
    %v1227 = vunpack.c.l.b16 %v336
    %v1228 = vunpack.c.h.b16 %v336
    %v1229 = vunpack.c.l.b16 %v337
    %v1230 = vunpack.c.h.b16 %v337
    %v1231 = vunpack.c.l.b16 %v338
    %v1232 = vunpack.c.h.b16 %v338
    %v1233 = vunpack.c.l.b16 %v339
    %v1234 = vunpack.c.h.b16 %v339
    %v1235 = vunpack.c.l.b16 %v340
    %v1236 = vunpack.c.h.b16 %v340
    %v1237 = vunpack.c.l.b16 %v341
    %v1238 = vunpack.c.h.b16 %v341
    %v1239 = vunpack.c.l.b16 %v342
    %v1240 = vunpack.c.h.b16 %v342
    %v1241 = vunpack.c.l.b16 %v343
    %v1242 = vunpack.c.h.b16 %v343
    %v1243 = vunpack.c.l.b16 %v344
    %v1244 = vunpack.c.h.b16 %v344
    %v1245 = vunpack.c.l.b16 %v345
    %v1246 = vunpack.c.h.b16 %v345
    %v1247 = vunpack.c.l.b16 %v346
    %v1248 = vunpack.c.h.b16 %v346
    %v1249 = vunpack.c.l.b16 %v347
    %v1250 = vunpack.c.h.b16 %v347
    %v1251 = vunpack.c.l.b16 %v348
    %v1252 = vunpack.c.h.b16 %v348
    %v1253 = vunpack.c.l.b16 %v349
    %v1254 = vunpack.c.h.b16 %v349
    %v1255 = vunpack.c.l.b16 %v350
    %v1256 = vunpack.c.h.b16 %v350
    %v1257 = vunpack.c.l.b16 %v351
    %v1258 = vunpack.c.h.b16 %v351
    %v1259 = vunpack.c.l.b16 %v352
    %v1260 = vunpack.c.h.b16 %v352
    %v1261 = vunpack.c.l.b16 %v353
    %v1262 = vunpack.c.h.b16 %v353
    %v1263 = vunpack.c.l.b16 %v354
    %v1264 = vunpack.c.h.b16 %v354
    %v1265 = vunpack.c.l.b16 %v355
    %v1266 = vunpack.c.h.b16 %v355
    %v1267 = vunpack.c.l.b16 %v356
    %v1268 = vunpack.c.h.b16 %v356
    %v1269 = vunpack.c.l.b16 %v357
    %v1270 = vunpack.c.h.b16 %v357
    %v1271 = vunpack.c.l.b16 %v358
    %v1272 = vunpack.c.h.b16 %v358
    %v1273 = vunpack.c.l.b16 %v359
    %v1274 = vunpack.c.h.b16 %v359
    %v1275 = vunpack.c.l.b16 %v360
    %v1276 = vunpack.c.h.b16 %v360
    %v1277 = vunpack.c.l.b16 %v361
    %v1278 = vunpack.c.h.b16 %v361
    %v1279 = vpack.c.b16 %v709, %v703
    %v1280 = vpack.c.b16 %v710, %v704
    %v1281 = vpack.c.b16 %v711, %v705
    %v1282 = vpack.c.b16 %v712, %v706
    %v1283 = vpack.c.b16 %v713, %v707
    %v1284 = vpack.c.b16 %v714, %v708
    %v1285 = vpack.c.b16 %v721, %v715
    %v1286 = vpack.c.b16 %v722, %v716
    %v1287 = vpack.c.b16 %v723, %v717
    %v1288 = vpack.c.b16 %v724, %v718
    %v1289 = vpack.c.b16 %v725, %v719
    %v1290 = vpack.c.b16 %v726, %v720
    %v1291 = vpack.c.b16 %v733, %v727
    %v1292 = vpack.c.b16 %v734, %v728
    %v1293 = vpack.c.b16 %v735, %v729
    %v1294 = vpack.c.b16 %v736, %v730
    %v1295 = vpack.c.b16 %v737, %v731
    %v1296 = vpack.c.b16 %v738, %v732
    %v1297 = vpack.c.b16 %v745, %v739
    %v1298 = vpack.c.b16 %v746, %v740
    %v1299 = vpack.c.b16 %v747, %v741
    %v1300 = vpack.c.b16 %v748, %v742
    %v1301 = vpack.c.b16 %v749, %v743
    %v1302 = vpack.c.b16 %v750, %v744
    %v1303 = vpack.c.b16 %v757, %v751
    %v1304 = vpack.c.b16 %v758, %v752
    %v1305 = vpack.c.b16 %v759, %v753
    %v1306 = vpack.c.b16 %v760, %v754
    %v1307 = vpack.c.b16 %v761, %v755
    %v1308 = vpack.c.b16 %v762, %v756
    %v1309 = vpack.c.b16 %v769, %v763
    %v1310 = vpack.c.b16 %v770, %v764
    %v1311 = vpack.c.b16 %v771, %v765
    %v1312 = vpack.c.b16 %v772, %v766
    %v1313 = vpack.c.b16 %v773, %v767
    %v1314 = vpack.c.b16 %v774, %v768
    %v1315 = vpack.c.b16 %v781, %v775
    %v1316 = vpack.c.b16 %v782, %v776
    %v1317 = vpack.c.b16 %v783, %v777
    %v1318 = vpack.c.b16 %v784, %v778
    %v1319 = vpack.c.b16 %v785, %v779
    %v1320 = vpack.c.b16 %v786, %v780
    %v1321 = vpack.c.b16 %v793, %v787
    %v1322 = vpack.c.b16 %v794, %v788
    %v1323 = vpack.c.b16 %v795, %v789
    %v1324 = vpack.c.b16 %v796, %v790
    %v1325 = vpack.c.b16 %v797, %v791
    %v1326 = vpack.c.b16 %v798, %v792
    %v1327 = vpack.c.b16 %v805, %v799
    %v1328 = vpack.c.b16 %v806, %v800
    %v1329 = vpack.c.b16 %v807, %v801
    %v1330 = vpack.c.b16 %v808, %v802
    %v1331 = vpack.c.b16 %v809, %v803
    %v1332 = vpack.c.b16 %v810, %v804
    %v1333 = vpack.c.b16 %v817, %v811
    %v1334 = vpack.c.b16 %v818, %v812
    %v1335 = vpack.c.b16 %v819, %v813
    %v1336 = vpack.c.b16 %v820, %v814
    %v1337 = vpack.c.b16 %v821, %v815
    %v1338 = vpack.c.b16 %v822, %v816
    %v1339 = vpack.c.b16 %v829, %v823
    %v1340 = vpack.c.b16 %v830, %v824
    %v1341 = vpack.c.b16 %v831, %v825
    %v1342 = vpack.c.b16 %v832, %v826
    %v1343 = vpack.c.b16 %v833, %v827
    %v1344 = vpack.c.b16 %v834, %v828
    %v1345 = vpack.c.b16 %v841, %v835
    %v1346 = vpack.c.b16 %v842, %v836
    %v1347 = vpack.c.b16 %v843, %v837
    %v1348 = vpack.c.b16 %v844, %v838
    %v1349 = vpack.c.b16 %v845, %v839
    %v1350 = vpack.c.b16 %v846, %v840
    %v1351 = vpack.c.b16 %v853, %v847
    %v1352 = vpack.c.b16 %v854, %v848
    %v1353 = vpack.c.b16 %v855, %v849
    %v1354 = vpack.c.b16 %v856, %v850
    %v1355 = vpack.c.b16 %v857, %v851
    %v1356 = vpack.c.b16 %v858, %v852
    %v1357 = vpack.c.b16 %v865, %v859
    %v1358 = vpack.c.b16 %v866, %v860
    %v1359 = vpack.c.b16 %v867, %v861
    %v1360 = vpack.c.b16 %v868, %v862
    %v1361 = vpack.c.b16 %v869, %v863
    %v1362 = vpack.c.b16 %v870, %v864
    %v1363 = vpack.c.b16 %v877, %v871
    %v1364 = vpack.c.b16 %v878, %v872
    %v1365 = vpack.c.b16 %v879, %v873
    %v1366 = vpack.c.b16 %v880, %v874
    %v1367 = vpack.c.b16 %v881, %v875
    %v1368 = vpack.c.b16 %v882, %v876
    %v1369 = vpack.c.b16 %v889, %v883
    %v1370 = vpack.c.b16 %v890, %v884
    %v1371 = vpack.c.b16 %v891, %v885
    %v1372 = vpack.c.b16 %v892, %v886
    %v1373 = vpack.c.b16 %v893, %v887
    %v1374 = vpack.c.b16 %v894, %v888
    %v1375 = vpack.c.b16 %v901, %v895
    %v1376 = vpack.c.b16 %v902, %v896
    %v1377 = vpack.c.b16 %v903, %v897
    %v1378 = vpack.c.b16 %v904, %v898
    %v1379 = vpack.c.b16 %v905, %v899
    %v1380 = vpack.c.b16 %v906, %v900
    %v1381 = vpack.c.b16 %v913, %v907
    %v1382 = vpack.c.b16 %v914, %v908
    %v1383 = vpack.c.b16 %v915, %v909
    %v1384 = vpack.c.b16 %v916, %v910
    %v1385 = vpack.c.b16 %v917, %v911
    %v1386 = vpack.c.b16 %v918, %v912
    %v1387 = vpack.c.b16 %v925, %v919
    %v1388 = vpack.c.b16 %v926, %v920
    %v1389 = vpack.c.b16 %v927, %v921
    %v1390 = vpack.c.b16 %v928, %v922
    %v1391 = vpack.c.b16 %v929, %v923
    %v1392 = vpack.c.b16 %v930, %v924
    %v1393 = vpack.c.b16 %v937, %v931
    %v1394 = vpack.c.b16 %v938, %v932
    %v1395 = vpack.c.b16 %v939, %v933
    %v1396 = vpack.c.b16 %v940, %v934
    %v1397 = vpack.c.b16 %v941, %v935
    %v1398 = vpack.c.b16 %v942, %v936
    %v1399 = vpack.c.b16 %v949, %v943
    %v1400 = vpack.c.b16 %v950, %v944
    %v1401 = vpack.c.b16 %v951, %v945
    %v1402 = vpack.c.b16 %v952, %v946
    %v1403 = vpack.c.b16 %v953, %v947
    %v1404 = vpack.c.b16 %v954, %v948
    %v1405 = vpack.c.b16 %v961, %v955
    %v1406 = vpack.c.b16 %v962, %v956
    %v1407 = vpack.c.b16 %v963, %v957
    %v1408 = vpack.c.b16 %v964, %v958
    %v1409 = vpack.c.b16 %v965, %v959
    %v1410 = vpack.c.b16 %v966, %v960
    %v1411 = vpack.c.b16 %v973, %v967
    %v1412 = vpack.c.b16 %v974, %v968
    %v1413 = vpack.c.b16 %v975, %v969
    %v1414 = vpack.c.b16 %v976, %v970
    %v1415 = vpack.c.b16 %v977, %v971
    %v1416 = vpack.c.b16 %v978, %v972
    %v1417 = vpack.c.b16 %v985, %v979
    %v1418 = vpack.c.b16 %v986, %v980
    %v1419 = vpack.c.b16 %v987, %v981
    %v1420 = vpack.c.b16 %v988, %v982
    %v1421 = vpack.c.b16 %v989, %v983
    %v1422 = vpack.c.b16 %v990, %v984
    %v1423 = vpack.c.b16 %v997, %v991
    %v1424 = vpack.c.b16 %v998, %v992
    %v1425 = vpack.c.b16 %v999, %v993
    %v1426 = vpack.c.b16 %v1000, %v994
    %v1427 = vpack.c.b16 %v1001, %v995
    %v1428 = vpack.c.b16 %v1002, %v996
    %v1429 = vpack.c.b16 %v1009, %v1003
    %v1430 = vpack.c.b16 %v1010, %v1004
    %v1431 = vpack.c.b16 %v1011, %v1005
    %v1432 = vpack.c.b16 %v1012, %v1006
    %v1433 = vpack.c.b16 %v1013, %v1007
    %v1434 = vpack.c.b16 %v1014, %v1008
    %v1435 = vpack.c.b16 %v1021, %v1015
    %v1436 = vpack.c.b16 %v1022, %v1016
    %v1437 = vpack.c.b16 %v1023, %v1017
    %v1438 = vpack.c.b16 %v1024, %v1018
    %v1439 = vpack.c.b16 %v1025, %v1019
    %v1440 = vpack.c.b16 %v1026, %v1020
    %v1441 = vpack.c.b16 %v1033, %v1027
    %v1442 = vpack.c.b16 %v1034, %v1028
    %v1443 = vpack.c.b16 %v1035, %v1029
    %v1444 = vpack.c.b16 %v1036, %v1030
    %v1445 = vpack.c.b16 %v1037, %v1031
    %v1446 = vpack.c.b16 %v1038, %v1032
    %v1447 = vpack.c.b16 %v1045, %v1039
    %v1448 = vpack.c.b16 %v1046, %v1040
    %v1449 = vpack.c.b16 %v1047, %v1041
    %v1450 = vpack.c.b16 %v1048, %v1042
    %v1451 = vpack.c.b16 %v1049, %v1043
    %v1452 = vpack.c.b16 %v1050, %v1044
    %v1453 = vpack.c.b16 %v1057, %v1051
    %v1454 = vpack.c.b16 %v1058, %v1052
    %v1455 = vpack.c.b16 %v1059, %v1053
    %v1456 = vpack.c.b16 %v1060, %v1054
    %v1457 = vpack.c.b16 %v1061, %v1055
    %v1458 = vpack.c.b16 %v1062, %v1056
    %v1459 = vpack.c.b16 %v1069, %v1063
    %v1460 = vpack.c.b16 %v1070, %v1064
    %v1461 = vpack.c.b16 %v1071, %v1065
    %v1462 = vpack.c.b16 %v1072, %v1066
    %v1463 = vpack.c.b16 %v1073, %v1067
    %v1464 = vpack.c.b16 %v1074, %v1068
    %v1465 = vpack.c.b16 %v1081, %v1075
    %v1466 = vpack.c.b16 %v1082, %v1076
    %v1467 = vpack.c.b16 %v1083, %v1077
    %v1468 = vpack.c.b16 %v1084, %v1078
    %v1469 = vpack.c.b16 %v1085, %v1079
    %v1470 = vpack.c.b16 %v1086, %v1080
    %v1471 = vpack.c.b16 %v1093, %v1087
    %v1472 = vpack.c.b16 %v1094, %v1088
    %v1473 = vpack.c.b16 %v1095, %v1089
    %v1474 = vpack.c.b16 %v1096, %v1090
    %v1475 = vpack.c.b16 %v1097, %v1091
    %v1476 = vpack.c.b16 %v1098, %v1092
    %v1477 = vpack.c.b16 %v1105, %v1099
    %v1478 = vpack.c.b16 %v1106, %v1100
    %v1479 = vpack.c.b16 %v1107, %v1101
    %v1480 = vpack.c.b16 %v1108, %v1102
    %v1481 = vpack.c.b16 %v1109, %v1103
    %v1482 = vpack.c.b16 %v1110, %v1104
    %v1483 = vpack.c.b16 %v1117, %v1111
    %v1484 = vpack.c.b16 %v1118, %v1112
    %v1485 = vpack.c.b16 %v1119, %v1113
    %v1486 = vpack.c.b16 %v1120, %v1114
    %v1487 = vpack.c.b16 %v1121, %v1115
    %v1488 = vpack.c.b16 %v1122, %v1116
    %v1489 = vpack.c.b16 %v1129, %v1123
    %v1490 = vpack.c.b16 %v1130, %v1124
    %v1491 = vpack.c.b16 %v1131, %v1125
    %v1492 = vpack.c.b16 %v1132, %v1126
    %v1493 = vpack.c.b16 %v1133, %v1127
    %v1494 = vpack.c.b16 %v1134, %v1128
    %v1495 = vpack.c.b16 %v1141, %v1135
    %v1496 = vpack.c.b16 %v1142, %v1136
    %v1497 = vpack.c.b16 %v1143, %v1137
    %v1498 = vpack.c.b16 %v1144, %v1138
    %v1499 = vpack.c.b16 %v1145, %v1139
    %v1500 = vpack.c.b16 %v1146, %v1140
    %v1501 = vpack.c.b16 %v1153, %v1147
    %v1502 = vpack.c.b16 %v1154, %v1148
    %v1503 = vpack.c.b16 %v1155, %v1149
    %v1504 = vpack.c.b16 %v1156, %v1150
    %v1505 = vpack.c.b16 %v1157, %v1151
    %v1506 = vpack.c.b16 %v1158, %v1152
    %v1507 = vpack.c.b16 %v1165, %v1159
    %v1508 = vpack.c.b16 %v1166, %v1160
    %v1509 = vpack.c.b16 %v1167, %v1161
    %v1510 = vpack.c.b16 %v1168, %v1162
    %v1511 = vpack.c.b16 %v1169, %v1163
    %v1512 = vpack.c.b16 %v1170, %v1164
    %v1513 = vpack.c.b16 %v1177, %v1171
    %v1514 = vpack.c.b16 %v1178, %v1172
    %v1515 = vpack.c.b16 %v1179, %v1173
    %v1516 = vpack.c.b16 %v1180, %v1174
    %v1517 = vpack.c.b16 %v1181, %v1175
    %v1518 = vpack.c.b16 %v1182, %v1176
    %v1519 = vpack.c.b16 %v1189, %v1183
    %v1520 = vpack.c.b16 %v1190, %v1184
    %v1521 = vpack.c.b16 %v1191, %v1185
    %v1522 = vpack.c.b16 %v1192, %v1186
    %v1523 = vpack.c.b16 %v1193, %v1187
    %v1524 = vpack.c.b16 %v1194, %v1188
    %v1525 = vpack.c.b16 %v1201, %v1195
    %v1526 = vpack.c.b16 %v1202, %v1196
    %v1527 = vpack.c.b16 %v1203, %v1197
    %v1528 = vpack.c.b16 %v1204, %v1198
    %v1529 = vpack.c.b16 %v1205, %v1199
    %v1530 = vpack.c.b16 %v1206, %v1200
    %v1531 = vpack.c.b16 %v1213, %v1207
    %v1532 = vpack.c.b16 %v1214, %v1208
    %v1533 = vpack.c.b16 %v1215, %v1209
    %v1534 = vpack.c.b16 %v1216, %v1210
    %v1535 = vpack.c.b16 %v1217, %v1211
    %v1536 = vpack.c.b16 %v1218, %v1212
    %v1537 = vpack.c.b16 %v1225, %v1219
    %v1538 = vpack.c.b16 %v1226, %v1220
    %v1539 = vpack.c.b16 %v1227, %v1221
    %v1540 = vpack.c.b16 %v1228, %v1222
    %v1541 = vpack.c.b16 %v1229, %v1223
    %v1542 = vpack.c.b16 %v1230, %v1224
    %v1543 = vpack.c.b16 %v1237, %v1231
    %v1544 = vpack.c.b16 %v1238, %v1232
    %v1545 = vpack.c.b16 %v1239, %v1233
    %v1546 = vpack.c.b16 %v1240, %v1234
    %v1547 = vpack.c.b16 %v1241, %v1235
    %v1548 = vpack.c.b16 %v1242, %v1236
    %v1549 = vpack.c.b16 %v1249, %v1243
    %v1550 = vpack.c.b16 %v1250, %v1244
    %v1551 = vpack.c.b16 %v1251, %v1245
    %v1552 = vpack.c.b16 %v1252, %v1246
    %v1553 = vpack.c.b16 %v1253, %v1247
    %v1554 = vpack.c.b16 %v1254, %v1248
    %v1555 = vpack.c.b16 %v1261, %v1255
    %v1556 = vpack.c.b16 %v1262, %v1256
    %v1557 = vpack.c.b16 %v1263, %v1257
    %v1558 = vpack.c.b16 %v1264, %v1258
    %v1559 = vpack.c.b16 %v1265, %v1259
    %v1560 = vpack.c.b16 %v1266, %v1260
    %v1561 = vpack.c.b16 %v1273, %v1267
    %v1562 = vpack.c.b16 %v1274, %v1268
    %v1563 = vpack.c.b16 %v1275, %v1269
    %v1564 = vpack.c.b16 %v1276, %v1270
    %v1565 = vpack.c.b16 %v1277, %v1271
    %v1566 = vpack.c.b16 %v1278, %v1272
    %1855 = vmatprep.subr.bf16.mxu0 %v1280
    %1856 = vmatpush1.bf16.msra.mxu0 %v1279
    %1857 = vmatprep.subr.bf16.mxu0 %v1286
    %1858 = vmatpush1.bf16.msra.mxu0 %v1285
    %1859 = vmatprep.subr.bf16.mxu0 %v1292
    %1860 = vmatpush1.bf16.msra.mxu0 %v1291
    %1861 = vmatprep.subr.bf16.mxu0 %v1298
    %1862 = vmatpush1.bf16.msra.mxu0 %v1297
    %1863 = vmatprep.subr.bf16.mxu0 %v1304
    %1864 = vmatpush1.bf16.msra.mxu0 %v1303
    %1865 = vmatprep.subr.bf16.mxu0 %v1310
    %1866 = vmatpush1.bf16.msra.mxu0 %v1309
    %1867 = vmatprep.subr.bf16.mxu0 %v1316
    %1868 = vmatpush1.bf16.msra.mxu0 %v1315
    %1869 = vmatprep.subr.bf16.mxu0 %v1322
    %1870 = vmatpush1.bf16.msra.mxu0 %v1321
    %1871 = vmatprep.subr.bf16.mxu0 %v1328
    %1872 = vmatpush1.bf16.msra.mxu0 %v1327
    %1873 = vmatprep.subr.bf16.mxu0 %v1334
    %1874 = vmatpush1.bf16.msra.mxu0 %v1333
    %1875 = vmatprep.subr.bf16.mxu0 %v1340
    %1876 = vmatpush1.bf16.msra.mxu0 %v1339
    %1877 = vmatprep.subr.bf16.mxu0 %v1346
    %1878 = vmatpush1.bf16.msra.mxu0 %v1345
    %1879 = vmatprep.subr.bf16.mxu0 %v1352
    %1880 = vmatpush1.bf16.msra.mxu0 %v1351
    %1881 = vmatprep.subr.bf16.mxu0 %v1358
    %1882 = vmatpush1.bf16.msra.mxu0 %v1357
    %1883 = vmatprep.subr.bf16.mxu0 %v1364
    %1884 = vmatpush1.bf16.msra.mxu0 %v1363
    %1885 = vmatprep.subr.bf16.mxu0 %v1370
    %1886 = vmatpush1.bf16.msra.mxu0 %v1369
    %1887 = vmatprep.mubr.bf16.mxu0 %v404
    %1888 = vmatmul.mubr.bf16.gmra.mrb[0].mxu0 %v403
    %v1889 = vpop.f32.mrb[0].mxu0
    %v1890 = vadd.f32 %v367, %v1889
    %v1891 = vpop.f32.mrb[0].mxu0
    %v1892 = vadd.f32 %v371, %v1891
    %v1893 = vpop.f32.mrb[0].mxu0
    %v1894 = vpop.f32.mrb[0].mxu0
    %1895 = vdwg.mxu0
    %1896 = vmatprep.subr.bf16.mxu0 %v1376
    %1897 = vmatpush1.bf16.msra.mxu0 %v1375
    %1898 = vmatprep.subr.bf16.mxu0 %v1382
    %1899 = vmatpush1.bf16.msra.mxu0 %v1381
    %1900 = vmatprep.subr.bf16.mxu0 %v1388
    %1901 = vmatpush1.bf16.msra.mxu0 %v1387
    %1902 = vmatprep.subr.bf16.mxu0 %v1394
    %1903 = vmatpush1.bf16.msra.mxu0 %v1393
    %1904 = vmatprep.subr.bf16.mxu0 %v1400
    %1905 = vmatpush1.bf16.msra.mxu0 %v1399
    %1906 = vmatprep.subr.bf16.mxu0 %v1406
    %1907 = vmatpush1.bf16.msra.mxu0 %v1405
    %1908 = vmatprep.subr.bf16.mxu0 %v1412
    %1909 = vmatpush1.bf16.msra.mxu0 %v1411
    %1910 = vmatprep.subr.bf16.mxu0 %v1418
    %1911 = vmatpush1.bf16.msra.mxu0 %v1417
    %1912 = vmatprep.subr.bf16.mxu0 %v1424
    %1913 = vmatpush1.bf16.msra.mxu0 %v1423
    %1914 = vmatprep.subr.bf16.mxu0 %v1430
    %1915 = vmatpush1.bf16.msra.mxu0 %v1429
    %1916 = vmatprep.subr.bf16.mxu0 %v1436
    %1917 = vmatpush1.bf16.msra.mxu0 %v1435
    %1918 = vmatprep.subr.bf16.mxu0 %v1442
    %1919 = vmatpush1.bf16.msra.mxu0 %v1441
    %1920 = vmatprep.subr.bf16.mxu0 %v1448
    %1921 = vmatpush1.bf16.msra.mxu0 %v1447
    %1922 = vmatprep.subr.bf16.mxu0 %v1454
    %1923 = vmatpush1.bf16.msra.mxu0 %v1453
    %1924 = vmatprep.subr.bf16.mxu0 %v1460
    %1925 = vmatpush1.bf16.msra.mxu0 %v1459
    %1926 = vmatprep.subr.bf16.mxu0 %v1466
    %1927 = vmatpush1.bf16.msra.mxu0 %v1465
    %1928 = vmatprep.mubr.bf16.mxu0 %v406
    %1929 = vmatmul.mubr.bf16.gmra.mrb[0].mxu0 %v405
    %v1930 = vpop.f32.mrb[0].mxu0
    %v1931 = vadd.f32 %v1890, %v1930
    %v1932 = vpop.f32.mrb[0].mxu0
    %v1933 = vadd.f32 %v1892, %v1932
    %v1934 = vpop.f32.mrb[0].mxu0
    %v1935 = vpop.f32.mrb[0].mxu0
    %1936 = vdwg.mxu0
    %1937 = vmatprep.subr.bf16.mxu0 %v1472
    %1938 = vmatpush1.bf16.msra.mxu0 %v1471
    %1939 = vmatprep.subr.bf16.mxu0 %v1478
    %1940 = vmatpush1.bf16.msra.mxu0 %v1477
    %1941 = vmatprep.subr.bf16.mxu0 %v1484
    %1942 = vmatpush1.bf16.msra.mxu0 %v1483
    %1943 = vmatprep.subr.bf16.mxu0 %v1490
    %1944 = vmatpush1.bf16.msra.mxu0 %v1489
    %1945 = vmatprep.subr.bf16.mxu0 %v1496
    %1946 = vmatpush1.bf16.msra.mxu0 %v1495
    %1947 = vmatprep.subr.bf16.mxu0 %v1502
    %1948 = vmatpush1.bf16.msra.mxu0 %v1501
    %1949 = vmatprep.subr.bf16.mxu0 %v1508
    %1950 = vmatpush1.bf16.msra.mxu0 %v1507
    %1951 = vmatprep.subr.bf16.mxu0 %v1514
    %1952 = vmatpush1.bf16.msra.mxu0 %v1513
    %1953 = vmatprep.subr.bf16.mxu0 %v1520
    %1954 = vmatpush1.bf16.msra.mxu0 %v1519
    %1955 = vmatprep.subr.bf16.mxu0 %v1526
    %1956 = vmatpush1.bf16.msra.mxu0 %v1525
    %1957 = vmatprep.subr.bf16.mxu0 %v1532
    %1958 = vmatpush1.bf16.msra.mxu0 %v1531
    %1959 = vmatprep.subr.bf16.mxu0 %v1538
    %1960 = vmatpush1.bf16.msra.mxu0 %v1537
    %1961 = vmatprep.subr.bf16.mxu0 %v1544
    %1962 = vmatpush1.bf16.msra.mxu0 %v1543
    %1963 = vmatprep.subr.bf16.mxu0 %v1550
    %1964 = vmatpush1.bf16.msra.mxu0 %v1549
    %1965 = vmatprep.subr.bf16.mxu0 %v1556
    %1966 = vmatpush1.bf16.msra.mxu0 %v1555
    %1967 = vmatprep.subr.bf16.mxu0 %v1562
    %1968 = vmatpush1.bf16.msra.mxu0 %v1561
    %1969 = vmatprep.mubr.bf16.mxu0 %v408
    %1970 = vmatmul.mubr.bf16.gmra.mrb[0].mxu0 %v407
    %v1971 = vpop.f32.mrb[0].mxu0
    %v1972 = vadd.f32 %v1931, %v1971
    %v1973 = vpop.f32.mrb[0].mxu0
    %v1974 = vadd.f32 %v1933, %v1973
    %v1975 = vpop.f32.mrb[0].mxu0
    %v1976 = vpop.f32.mrb[0].mxu0
    %1977 = vdwg.mxu0
    %1978 = vmatprep.subr.bf16.mxu0 %v1282
    %1979 = vmatpush1.bf16.msra.mxu0 %v1281
    %1980 = vmatprep.subr.bf16.mxu0 %v1288
    %1981 = vmatpush1.bf16.msra.mxu0 %v1287
    %1982 = vmatprep.subr.bf16.mxu0 %v1294
    %1983 = vmatpush1.bf16.msra.mxu0 %v1293
    %1984 = vmatprep.subr.bf16.mxu0 %v1300
    %1985 = vmatpush1.bf16.msra.mxu0 %v1299
    %1986 = vmatprep.subr.bf16.mxu0 %v1306
    %1987 = vmatpush1.bf16.msra.mxu0 %v1305
    %1988 = vmatprep.subr.bf16.mxu0 %v1312
    %1989 = vmatpush1.bf16.msra.mxu0 %v1311
    %1990 = vmatprep.subr.bf16.mxu0 %v1318
    %1991 = vmatpush1.bf16.msra.mxu0 %v1317
    %1992 = vmatprep.subr.bf16.mxu0 %v1324
    %1993 = vmatpush1.bf16.msra.mxu0 %v1323
    %1994 = vmatprep.subr.bf16.mxu0 %v1330
    %1995 = vmatpush1.bf16.msra.mxu0 %v1329
    %1996 = vmatprep.subr.bf16.mxu0 %v1336
    %1997 = vmatpush1.bf16.msra.mxu0 %v1335
    %1998 = vmatprep.subr.bf16.mxu0 %v1342
    %1999 = vmatpush1.bf16.msra.mxu0 %v1341
    %2000 = vmatprep.subr.bf16.mxu0 %v1348
    %2001 = vmatpush1.bf16.msra.mxu0 %v1347
    %2002 = vmatprep.subr.bf16.mxu0 %v1354
    %2003 = vmatpush1.bf16.msra.mxu0 %v1353
    %2004 = vmatprep.subr.bf16.mxu0 %v1360
    %2005 = vmatpush1.bf16.msra.mxu0 %v1359
    %2006 = vmatprep.subr.bf16.mxu0 %v1366
    %2007 = vmatpush1.bf16.msra.mxu0 %v1365
    %2008 = vmatprep.subr.bf16.mxu0 %v1372
    %2009 = vmatpush1.bf16.msra.mxu0 %v1371
    %2010 = vmatprep.mubr.bf16.mxu0 %v404
    %2011 = vmatmul.mubr.bf16.gmra.mrb[0].mxu0 %v403
    %v2012 = vpop.f32.mrb[0].mxu0
    %v2013 = vadd.f32 %v375, %v2012
    %v2014 = vpop.f32.mrb[0].mxu0
    %v2015 = vadd.f32 %v379, %v2014
    %v2016 = vpop.f32.mrb[0].mxu0
    %v2017 = vpop.f32.mrb[0].mxu0
    %2018 = vdwg.mxu0
    %2019 = vmatprep.subr.bf16.mxu0 %v1378
    %2020 = vmatpush1.bf16.msra.mxu0 %v1377
    %2021 = vmatprep.subr.bf16.mxu0 %v1384
    %2022 = vmatpush1.bf16.msra.mxu0 %v1383
    %2023 = vmatprep.subr.bf16.mxu0 %v1390
    %2024 = vmatpush1.bf16.msra.mxu0 %v1389
    %2025 = vmatprep.subr.bf16.mxu0 %v1396
    %2026 = vmatpush1.bf16.msra.mxu0 %v1395
    %2027 = vmatprep.subr.bf16.mxu0 %v1402
    %2028 = vmatpush1.bf16.msra.mxu0 %v1401
    %2029 = vmatprep.subr.bf16.mxu0 %v1408
    %2030 = vmatpush1.bf16.msra.mxu0 %v1407
    %2031 = vmatprep.subr.bf16.mxu0 %v1414
    %2032 = vmatpush1.bf16.msra.mxu0 %v1413
    %2033 = vmatprep.subr.bf16.mxu0 %v1420
    %2034 = vmatpush1.bf16.msra.mxu0 %v1419
    %2035 = vmatprep.subr.bf16.mxu0 %v1426
    %2036 = vmatpush1.bf16.msra.mxu0 %v1425
    %2037 = vmatprep.subr.bf16.mxu0 %v1432
    %2038 = vmatpush1.bf16.msra.mxu0 %v1431
    %2039 = vmatprep.subr.bf16.mxu0 %v1438
    %2040 = vmatpush1.bf16.msra.mxu0 %v1437
    %2041 = vmatprep.subr.bf16.mxu0 %v1444
    %2042 = vmatpush1.bf16.msra.mxu0 %v1443
    %2043 = vmatprep.subr.bf16.mxu0 %v1450
    %2044 = vmatpush1.bf16.msra.mxu0 %v1449
    %2045 = vmatprep.subr.bf16.mxu0 %v1456
    %2046 = vmatpush1.bf16.msra.mxu0 %v1455
    %2047 = vmatprep.subr.bf16.mxu0 %v1462
    %2048 = vmatpush1.bf16.msra.mxu0 %v1461
    %2049 = vmatprep.subr.bf16.mxu0 %v1468
    %2050 = vmatpush1.bf16.msra.mxu0 %v1467
    %2051 = vmatprep.mubr.bf16.mxu0 %v406
    %2052 = vmatmul.mubr.bf16.gmra.mrb[0].mxu0 %v405
    %v2053 = vpop.f32.mrb[0].mxu0
    %v2054 = vadd.f32 %v2013, %v2053
    %v2055 = vpop.f32.mrb[0].mxu0
    %v2056 = vadd.f32 %v2015, %v2055
    %v2057 = vpop.f32.mrb[0].mxu0
    %v2058 = vpop.f32.mrb[0].mxu0
    %2059 = vdwg.mxu0
    %2060 = vmatprep.subr.bf16.mxu0 %v1474
    %2061 = vmatpush1.bf16.msra.mxu0 %v1473
    %2062 = vmatprep.subr.bf16.mxu0 %v1480
    %2063 = vmatpush1.bf16.msra.mxu0 %v1479
    %2064 = vmatprep.subr.bf16.mxu0 %v1486
    %2065 = vmatpush1.bf16.msra.mxu0 %v1485
    %2066 = vmatprep.subr.bf16.mxu0 %v1492
    %2067 = vmatpush1.bf16.msra.mxu0 %v1491
    %2068 = vmatprep.subr.bf16.mxu0 %v1498
    %2069 = vmatpush1.bf16.msra.mxu0 %v1497
    %2070 = vmatprep.subr.bf16.mxu0 %v1504
    %2071 = vmatpush1.bf16.msra.mxu0 %v1503
    %2072 = vmatprep.subr.bf16.mxu0 %v1510
    %2073 = vmatpush1.bf16.msra.mxu0 %v1509
    %2074 = vmatprep.subr.bf16.mxu0 %v1516
    %2075 = vmatpush1.bf16.msra.mxu0 %v1515
    %2076 = vmatprep.subr.bf16.mxu0 %v1522
    %2077 = vmatpush1.bf16.msra.mxu0 %v1521
    %2078 = vmatprep.subr.bf16.mxu0 %v1528
    %2079 = vmatpush1.bf16.msra.mxu0 %v1527
    %2080 = vmatprep.subr.bf16.mxu0 %v1534
    %2081 = vmatpush1.bf16.msra.mxu0 %v1533
    %2082 = vmatprep.subr.bf16.mxu0 %v1540
    %2083 = vmatpush1.bf16.msra.mxu0 %v1539
    %2084 = vmatprep.subr.bf16.mxu0 %v1546
    %2085 = vmatpush1.bf16.msra.mxu0 %v1545
    %2086 = vmatprep.subr.bf16.mxu0 %v1552
    %2087 = vmatpush1.bf16.msra.mxu0 %v1551
    %2088 = vmatprep.subr.bf16.mxu0 %v1558
    %2089 = vmatpush1.bf16.msra.mxu0 %v1557
    %2090 = vmatprep.subr.bf16.mxu0 %v1564
    %2091 = vmatpush1.bf16.msra.mxu0 %v1563
    %2092 = vmatprep.mubr.bf16.mxu0 %v408
    %2093 = vmatmul.mubr.bf16.gmra.mrb[0].mxu0 %v407
    %v2094 = vpop.f32.mrb[0].mxu0
    %v2095 = vadd.f32 %v2054, %v2094
    %v2096 = vpop.f32.mrb[0].mxu0
    %v2097 = vadd.f32 %v2056, %v2096
    %v2098 = vpop.f32.mrb[0].mxu0
    %v2099 = vpop.f32.mrb[0].mxu0
    %2100 = vdwg.mxu0
    %2101 = vmatprep.subr.bf16.mxu0 %v1284
    %2102 = vmatpush1.bf16.msra.mxu0 %v1283
    %2103 = vmatprep.subr.bf16.mxu0 %v1290
    %2104 = vmatpush1.bf16.msra.mxu0 %v1289
    %2105 = vmatprep.subr.bf16.mxu0 %v1296
    %2106 = vmatpush1.bf16.msra.mxu0 %v1295
    %2107 = vmatprep.subr.bf16.mxu0 %v1302
    %2108 = vmatpush1.bf16.msra.mxu0 %v1301
    %2109 = vmatprep.subr.bf16.mxu0 %v1308
    %2110 = vmatpush1.bf16.msra.mxu0 %v1307
    %2111 = vmatprep.subr.bf16.mxu0 %v1314
    %2112 = vmatpush1.bf16.msra.mxu0 %v1313
    %2113 = vmatprep.subr.bf16.mxu0 %v1320
    %2114 = vmatpush1.bf16.msra.mxu0 %v1319
    %2115 = vmatprep.subr.bf16.mxu0 %v1326
    %2116 = vmatpush1.bf16.msra.mxu0 %v1325
    %2117 = vmatprep.subr.bf16.mxu0 %v1332
    %2118 = vmatpush1.bf16.msra.mxu0 %v1331
    %2119 = vmatprep.subr.bf16.mxu0 %v1338
    %2120 = vmatpush1.bf16.msra.mxu0 %v1337
    %2121 = vmatprep.subr.bf16.mxu0 %v1344
    %2122 = vmatpush1.bf16.msra.mxu0 %v1343
    %2123 = vmatprep.subr.bf16.mxu0 %v1350
    %2124 = vmatpush1.bf16.msra.mxu0 %v1349
    %2125 = vmatprep.subr.bf16.mxu0 %v1356
    %2126 = vmatpush1.bf16.msra.mxu0 %v1355
    %2127 = vmatprep.subr.bf16.mxu0 %v1362
    %2128 = vmatpush1.bf16.msra.mxu0 %v1361
    %2129 = vmatprep.subr.bf16.mxu0 %v1368
    %2130 = vmatpush1.bf16.msra.mxu0 %v1367
    %2131 = vmatprep.subr.bf16.mxu0 %v1374
    %2132 = vmatpush1.bf16.msra.mxu0 %v1373
    %2133 = vmatprep.mubr.bf16.mxu0 %v404
    %2134 = vmatmul.mubr.bf16.gmra.mrb[0].mxu0 %v403
    %v2135 = vpop.f32.mrb[0].mxu0
    %v2136 = vadd.f32 %v383, %v2135
    %v2137 = vpop.f32.mrb[0].mxu0
    %v2138 = vadd.f32 %v387, %v2137
    %v2139 = vpop.f32.mrb[0].mxu0
    %v2140 = vpop.f32.mrb[0].mxu0
    %2141 = vdwg.mxu0
    %2142 = vmatprep.subr.bf16.mxu0 %v1380
    %2143 = vmatpush1.bf16.msra.mxu0 %v1379
    %2144 = vmatprep.subr.bf16.mxu0 %v1386
    %2145 = vmatpush1.bf16.msra.mxu0 %v1385
    %2146 = vmatprep.subr.bf16.mxu0 %v1392
    %2147 = vmatpush1.bf16.msra.mxu0 %v1391
    %2148 = vmatprep.subr.bf16.mxu0 %v1398
    %2149 = vmatpush1.bf16.msra.mxu0 %v1397
    %2150 = vmatprep.subr.bf16.mxu0 %v1404
    %2151 = vmatpush1.bf16.msra.mxu0 %v1403
    %2152 = vmatprep.subr.bf16.mxu0 %v1410
    %2153 = vmatpush1.bf16.msra.mxu0 %v1409
    %2154 = vmatprep.subr.bf16.mxu0 %v1416
    %2155 = vmatpush1.bf16.msra.mxu0 %v1415
    %2156 = vmatprep.subr.bf16.mxu0 %v1422
    %2157 = vmatpush1.bf16.msra.mxu0 %v1421
    %2158 = vmatprep.subr.bf16.mxu0 %v1428
    %2159 = vmatpush1.bf16.msra.mxu0 %v1427
    %2160 = vmatprep.subr.bf16.mxu0 %v1434
    %2161 = vmatpush1.bf16.msra.mxu0 %v1433
    %2162 = vmatprep.subr.bf16.mxu0 %v1440
    %2163 = vmatpush1.bf16.msra.mxu0 %v1439
    %2164 = vmatprep.subr.bf16.mxu0 %v1446
    %2165 = vmatpush1.bf16.msra.mxu0 %v1445
    %2166 = vmatprep.subr.bf16.mxu0 %v1452
    %2167 = vmatpush1.bf16.msra.mxu0 %v1451
    %2168 = vmatprep.subr.bf16.mxu0 %v1458
    %2169 = vmatpush1.bf16.msra.mxu0 %v1457
    %2170 = vmatprep.subr.bf16.mxu0 %v1464
    %2171 = vmatpush1.bf16.msra.mxu0 %v1463
    %2172 = vmatprep.subr.bf16.mxu0 %v1470
    %2173 = vmatpush1.bf16.msra.mxu0 %v1469
    %2174 = vmatprep.mubr.bf16.mxu0 %v406
    %2175 = vmatmul.mubr.bf16.gmra.mrb[0].mxu0 %v405
    %v2176 = vpop.f32.mrb[0].mxu0
    %v2177 = vadd.f32 %v2136, %v2176
    %v2178 = vpop.f32.mrb[0].mxu0
    %v2179 = vadd.f32 %v2138, %v2178
    %v2180 = vpop.f32.mrb[0].mxu0
    %v2181 = vpop.f32.mrb[0].mxu0
    %2182 = vdwg.mxu0
    %2183 = vmatprep.subr.bf16.mxu0 %v1476
    %2184 = vmatpush1.bf16.msra.mxu0 %v1475
    %2185 = vmatprep.subr.bf16.mxu0 %v1482
    %2186 = vmatpush1.bf16.msra.mxu0 %v1481
    %2187 = vmatprep.subr.bf16.mxu0 %v1488
    %2188 = vmatpush1.bf16.msra.mxu0 %v1487
    %2189 = vmatprep.subr.bf16.mxu0 %v1494
    %2190 = vmatpush1.bf16.msra.mxu0 %v1493
    %2191 = vmatprep.subr.bf16.mxu0 %v1500
    %2192 = vmatpush1.bf16.msra.mxu0 %v1499
    %2193 = vmatprep.subr.bf16.mxu0 %v1506
    %2194 = vmatpush1.bf16.msra.mxu0 %v1505
    %2195 = vmatprep.subr.bf16.mxu0 %v1512
    %2196 = vmatpush1.bf16.msra.mxu0 %v1511
    %2197 = vmatprep.subr.bf16.mxu0 %v1518
    %2198 = vmatpush1.bf16.msra.mxu0 %v1517
    %2199 = vmatprep.subr.bf16.mxu0 %v1524
    %2200 = vmatpush1.bf16.msra.mxu0 %v1523
    %2201 = vmatprep.subr.bf16.mxu0 %v1530
    %2202 = vmatpush1.bf16.msra.mxu0 %v1529
    %2203 = vmatprep.subr.bf16.mxu0 %v1536
    %2204 = vmatpush1.bf16.msra.mxu0 %v1535
    %2205 = vmatprep.subr.bf16.mxu0 %v1542
    %2206 = vmatpush1.bf16.msra.mxu0 %v1541
    %2207 = vmatprep.subr.bf16.mxu0 %v1548
    %2208 = vmatpush1.bf16.msra.mxu0 %v1547
    %2209 = vmatprep.subr.bf16.mxu0 %v1554
    %2210 = vmatpush1.bf16.msra.mxu0 %v1553
    %2211 = vmatprep.subr.bf16.mxu0 %v1560
    %2212 = vmatpush1.bf16.msra.mxu0 %v1559
    %2213 = vmatprep.subr.bf16.mxu0 %v1566
    %2214 = vmatpush1.bf16.msra.mxu0 %v1565
    %2215 = vmatprep.mubr.bf16.mxu0 %v408
    %2216 = vmatmul.mubr.bf16.gmra.mrb[0].mxu0 %v407
    %v2217 = vpop.f32.mrb[0].mxu0
    %v2218 = vadd.f32 %v2177, %v2217
    %v2219 = vpop.f32.mrb[0].mxu0
    %v2220 = vadd.f32 %v2179, %v2219
    %v2221 = vpop.f32.mrb[0].mxu0
    %v2222 = vpop.f32.mrb[0].mxu0
    %2223 = vdwg.mxu0
    %v2224 = vtanh.pop %v1972
    %v2225 = vtanh.pop %v1974
    %v2226 = vtanh.pop %v2095
    %v2227 = vtanh.pop %v2097
    %v2228 = vtanh.pop %v2218
    %v2229 = vtanh.pop %v2220
    %v2230 = vld [vmem:[#allocation6] sm:$0xff]
    %v2231 = vld [vmem:[#allocation6 + $0x8] sm:$0xff]
    %v2232 = vld [vmem:[#allocation6 + $0x10] sm:$0xff]
    %v2233 = vld [vmem:[#allocation6 + $0x18] sm:$0xff]
    %v2234 = vld [vmem:[#allocation6 + $0x20] sm:$0xff]
    %v2235 = vld [vmem:[#allocation6 + $0x28] sm:$0xff]
    %v2236 = vld [vmem:[#allocation6 + $0x30] sm:$0xff]
    %v2237 = vld [vmem:[#allocation6 + $0x38] sm:$0xff]
    %v2238 = vld [vmem:[#allocation6 + $0x40] sm:$0xff]
    %v2239 = vld [vmem:[#allocation6 + $0x48] sm:$0xff]
    %v2240 = vld [vmem:[#allocation6 + $0x50] sm:$0xff]
    %v2241 = vld [vmem:[#allocation6 + $0x58] sm:$0xff]
    %v2242 = vld [vmem:[#allocation6 + $0x60] sm:$0xff]
    %v2243 = vld [vmem:[#allocation6 + $0x68] sm:$0xff]
    %v2244 = vld [vmem:[#allocation6 + $0x70] sm:$0xff]
    %v2245 = vld [vmem:[#allocation6 + $0x78] sm:$0xff]
    %v2246 = vld [vmem:[#allocation6 + $0x80] sm:$0xff]
    %v2247 = vld [vmem:[#allocation6 + $0x88] sm:$0xff]
    %v2248 = vld [vmem:[#allocation6 + $0x90] sm:$0xff]
    %v2249 = vld [vmem:[#allocation6 + $0x98] sm:$0xff]
    %v2250 = vld [vmem:[#allocation6 + $0xa0] sm:$0xff]
    %v2251 = vld [vmem:[#allocation6 + $0xa8] sm:$0xff]
    %v2252 = vld [vmem:[#allocation6 + $0xb0] sm:$0xff]
    %v2253 = vld [vmem:[#allocation6 + $0xb8] sm:$0xff]
    %v2254 = vld [vmem:[#allocation6 + $0xc0] sm:$0xff]
    %v2255 = vld [vmem:[#allocation6 + $0xc8] sm:$0xff]
    %v2256 = vld [vmem:[#allocation6 + $0xd0] sm:$0xff]
    %v2257 = vld [vmem:[#allocation6 + $0xd8] sm:$0xff]
    %v2258 = vld [vmem:[#allocation6 + $0xe0] sm:$0xff]
    %v2259 = vld [vmem:[#allocation6 + $0xe8] sm:$0xff]
    %v2260 = vld [vmem:[#allocation6 + $0xf0] sm:$0xff]
    %v2261 = vld [vmem:[#allocation6 + $0xf8] sm:$0xff]
    %v2262 = vld [vmem:[#allocation6 + $0x100] sm:$0xff]
    %v2263 = vld [vmem:[#allocation6 + $0x108] sm:$0xff]
    %v2264 = vld [vmem:[#allocation6 + $0x110] sm:$0xff]
    %v2265 = vld [vmem:[#allocation6 + $0x118] sm:$0xff]
    %v2266 = vld [vmem:[#allocation6 + $0x120] sm:$0xff]
    %v2267 = vld [vmem:[#allocation6 + $0x128] sm:$0xff]
    %v2268 = vld [vmem:[#allocation6 + $0x130] sm:$0xff]
    %v2269 = vld [vmem:[#allocation6 + $0x138] sm:$0xff]
    %v2270 = vld [vmem:[#allocation6 + $0x140] sm:$0xff]
    %v2271 = vld [vmem:[#allocation6 + $0x148] sm:$0xff]
    %v2272 = vld [vmem:[#allocation6 + $0x150] sm:$0xff]
    %v2273 = vld [vmem:[#allocation6 + $0x158] sm:$0xff]
    %v2274 = vld [vmem:[#allocation6 + $0x160] sm:$0xff]
    %v2275 = vld [vmem:[#allocation6 + $0x168] sm:$0xff]
    %v2276 = vld [vmem:[#allocation6 + $0x170] sm:$0xff]
    %v2277 = vld [vmem:[#allocation6 + $0x178] sm:$0xff]
    %v2278 = vld [vmem:[#allocation6 + $0x180] sm:$0xff]
    %v2279 = vld [vmem:[#allocation6 + $0x188] sm:$0xff]
    %v2280 = vld [vmem:[#allocation6 + $0x190] sm:$0xff]
    %v2281 = vld [vmem:[#allocation6 + $0x198] sm:$0xff]
    %v2282 = vld [vmem:[#allocation6 + $0x1a0] sm:$0xff]
    %v2283 = vld [vmem:[#allocation6 + $0x1a8] sm:$0xff]
    %v2284 = vld [vmem:[#allocation6 + $0x1b0] sm:$0xff]
    %v2285 = vld [vmem:[#allocation6 + $0x1b8] sm:$0xff]
    %v2286 = vld [vmem:[#allocation6 + $0x1c0] sm:$0xff]
    %v2287 = vld [vmem:[#allocation6 + $0x1c8] sm:$0xff]
    %v2288 = vld [vmem:[#allocation6 + $0x1d0] sm:$0xff]
    %v2289 = vld [vmem:[#allocation6 + $0x1d8] sm:$0xff]
    %v2290 = vld [vmem:[#allocation6 + $0x1e0] sm:$0xff]
    %v2291 = vld [vmem:[#allocation6 + $0x1e8] sm:$0xff]
    %v2292 = vld [vmem:[#allocation6 + $0x1f0] sm:$0xff]
    %v2293 = vld [vmem:[#allocation6 + $0x1f8] sm:$0xff]
    %v2294 = vld [vmem:[#allocation6 + $0x200] sm:$0xff]
    %v2295 = vld [vmem:[#allocation6 + $0x208] sm:$0xff]
    %v2296 = vld [vmem:[#allocation6 + $0x210] sm:$0xff]
    %v2297 = vld [vmem:[#allocation6 + $0x218] sm:$0xff]
    %v2298 = vld [vmem:[#allocation6 + $0x220] sm:$0xff]
    %v2299 = vld [vmem:[#allocation6 + $0x228] sm:$0xff]
    %v2300 = vld [vmem:[#allocation6 + $0x230] sm:$0xff]
    %v2301 = vld [vmem:[#allocation6 + $0x238] sm:$0xff]
    %v2302 = vld [vmem:[#allocation6 + $0x240] sm:$0xff]
    %v2303 = vld [vmem:[#allocation6 + $0x248] sm:$0xff]
    %v2304 = vld [vmem:[#allocation6 + $0x250] sm:$0xff]
    %v2305 = vld [vmem:[#allocation6 + $0x258] sm:$0xff]
    %v2306 = vld [vmem:[#allocation6 + $0x260] sm:$0xff]
    %v2307 = vld [vmem:[#allocation6 + $0x268] sm:$0xff]
    %v2308 = vld [vmem:[#allocation6 + $0x270] sm:$0xff]
    %v2309 = vld [vmem:[#allocation6 + $0x278] sm:$0xff]
    %v2310 = vld [vmem:[#allocation6 + $0x280] sm:$0xff]
    %v2311 = vld [vmem:[#allocation6 + $0x288] sm:$0xff]
    %v2312 = vld [vmem:[#allocation6 + $0x290] sm:$0xff]
    %v2313 = vld [vmem:[#allocation6 + $0x298] sm:$0xff]
    %v2314 = vld [vmem:[#allocation6 + $0x2a0] sm:$0xff]
    %v2315 = vld [vmem:[#allocation6 + $0x2a8] sm:$0xff]
    %v2316 = vld [vmem:[#allocation6 + $0x2b0] sm:$0xff]
    %v2317 = vld [vmem:[#allocation6 + $0x2b8] sm:$0xff]
    %v2318 = vld [vmem:[#allocation6 + $0x2c0] sm:$0xff]
    %v2319 = vld [vmem:[#allocation6 + $0x2c8] sm:$0xff]
    %v2320 = vld [vmem:[#allocation6 + $0x2d0] sm:$0xff]
    %v2321 = vld [vmem:[#allocation6 + $0x2d8] sm:$0xff]
    %v2322 = vld [vmem:[#allocation6 + $0x2e0] sm:$0xff]
    %v2323 = vld [vmem:[#allocation6 + $0x2e8] sm:$0xff]
    %v2324 = vld [vmem:[#allocation6 + $0x2f0] sm:$0xff]
    %v2325 = vld [vmem:[#allocation6 + $0x2f8] sm:$0xff]
    %2326 = vmatprep.subr.mxu0 0.0
    %2327 = vmatpush1.msra.mxu0 %v2230
    %2328 = vmatprep.subr.mxu0 0.0
    %2329 = vmatpush1.msra.mxu0 %v2231
    %2330 = vmatprep.subr.mxu0 0.0
    %2331 = vmatpush1.msra.mxu0 %v2232
    %2332 = vmatprep.subr.mxu0 0.0
    %2333 = vmatpush1.msra.mxu0 %v2233
    %2334 = vmatprep.subr.mxu0 0.0
    %2335 = vmatpush1.msra.mxu0 %v2234
    %2336 = vmatprep.subr.mxu0 0.0
    %2337 = vmatpush1.msra.mxu0 %v2235
    %2338 = vmatprep.subr.mxu0 0.0
    %2339 = vmatpush1.msra.mxu0 %v2236
    %2340 = vmatprep.subr.mxu0 0.0
    %2341 = vmatpush1.msra.mxu0 %v2237
    %2342 = vmatprep.subr.mxu0 0.0
    %2343 = vmatpush1.msra.mxu0 %v2238
    %2344 = vmatprep.subr.mxu0 0.0
    %2345 = vmatpush1.msra.mxu0 %v2239
    %2346 = vmatprep.subr.mxu0 0.0
    %2347 = vmatpush1.msra.mxu0 %v2240
    %2348 = vmatprep.subr.mxu0 0.0
    %2349 = vmatpush1.msra.mxu0 %v2241
    %2350 = vmatprep.subr.mxu0 0.0
    %2351 = vmatpush1.msra.mxu0 %v2242
    %2352 = vmatprep.subr.mxu0 0.0
    %2353 = vmatpush1.msra.mxu0 %v2243
    %2354 = vmatprep.subr.mxu0 0.0
    %2355 = vmatpush1.msra.mxu0 %v2244
    %2356 = vmatprep.subr.mxu0 0.0
    %2357 = vmatpush1.msra.mxu0 %v2245
    %2358 = vmatprep.subr.mxu0 0.0
    %2359 = vmatpush1.msra.mxu0 %v2246
    %2360 = vmatprep.subr.mxu0 0.0
    %2361 = vmatpush1.msra.mxu0 %v2247
    %2362 = vmatprep.subr.mxu0 0.0
    %2363 = vmatpush1.msra.mxu0 %v2248
    %2364 = vmatprep.subr.mxu0 0.0
    %2365 = vmatpush1.msra.mxu0 %v2249
    %2366 = vmatprep.subr.mxu0 0.0
    %2367 = vmatpush1.msra.mxu0 %v2250
    %2368 = vmatprep.subr.mxu0 0.0
    %2369 = vmatpush1.msra.mxu0 %v2251
    %2370 = vmatprep.subr.mxu0 0.0
    %2371 = vmatpush1.msra.mxu0 %v2252
    %2372 = vmatprep.subr.mxu0 0.0
    %2373 = vmatpush1.msra.mxu0 %v2253
    %2374 = vmatprep.subr.mxu0 0.0
    %2375 = vmatpush1.msra.mxu0 %v2254
    %2376 = vmatprep.subr.mxu0 0.0
    %2377 = vmatpush1.msra.mxu0 %v2255
    %2378 = vmatprep.subr.mxu0 0.0
    %2379 = vmatpush1.msra.mxu0 %v2256
    %2380 = vmatprep.subr.mxu0 0.0
    %2381 = vmatpush1.msra.mxu0 %v2257
    %2382 = vmatprep.subr.mxu0 0.0
    %2383 = vmatpush1.msra.mxu0 %v2258
    %2384 = vmatprep.subr.mxu0 0.0
    %2385 = vmatpush1.msra.mxu0 %v2259
    %2386 = vmatprep.subr.mxu0 0.0
    %2387 = vmatpush1.msra.mxu0 %v2260
    %2388 = vmatprep.subr.mxu0 0.0
    %2389 = vmatpush1.msra.mxu0 %v2261
    %2390 = vmatprep.mubr.f32.mxu0 %v2225
    %2391 = vmatmul.mubr.f32.gmra.mrb[0].mxu0 %v2224
    %v2392 = vpop.f32.mrb[0].mxu0
    %v2393 = vadd.f32 0.0, %v2392
    %v2394 = vpop.f32.mrb[0].mxu0
    %2395 = vdwg.mxu0
    %2396 = vmatprep.subr.mxu0 0.0
    %2397 = vmatpush1.msra.mxu0 %v2262
    %2398 = vmatprep.subr.mxu0 0.0
    %2399 = vmatpush1.msra.mxu0 %v2263
    %2400 = vmatprep.subr.mxu0 0.0
    %2401 = vmatpush1.msra.mxu0 %v2264
    %2402 = vmatprep.subr.mxu0 0.0
    %2403 = vmatpush1.msra.mxu0 %v2265
    %2404 = vmatprep.subr.mxu0 0.0
    %2405 = vmatpush1.msra.mxu0 %v2266
    %2406 = vmatprep.subr.mxu0 0.0
    %2407 = vmatpush1.msra.mxu0 %v2267
    %2408 = vmatprep.subr.mxu0 0.0
    %2409 = vmatpush1.msra.mxu0 %v2268
    %2410 = vmatprep.subr.mxu0 0.0
    %2411 = vmatpush1.msra.mxu0 %v2269
    %2412 = vmatprep.subr.mxu0 0.0
    %2413 = vmatpush1.msra.mxu0 %v2270
    %2414 = vmatprep.subr.mxu0 0.0
    %2415 = vmatpush1.msra.mxu0 %v2271
    %2416 = vmatprep.subr.mxu0 0.0
    %2417 = vmatpush1.msra.mxu0 %v2272
    %2418 = vmatprep.subr.mxu0 0.0
    %2419 = vmatpush1.msra.mxu0 %v2273
    %2420 = vmatprep.subr.mxu0 0.0
    %2421 = vmatpush1.msra.mxu0 %v2274
    %2422 = vmatprep.subr.mxu0 0.0
    %2423 = vmatpush1.msra.mxu0 %v2275
    %2424 = vmatprep.subr.mxu0 0.0
    %2425 = vmatpush1.msra.mxu0 %v2276
    %2426 = vmatprep.subr.mxu0 0.0
    %2427 = vmatpush1.msra.mxu0 %v2277
    %2428 = vmatprep.subr.mxu0 0.0
    %2429 = vmatpush1.msra.mxu0 %v2278
    %2430 = vmatprep.subr.mxu0 0.0
    %2431 = vmatpush1.msra.mxu0 %v2279
    %2432 = vmatprep.subr.mxu0 0.0
    %2433 = vmatpush1.msra.mxu0 %v2280
    %2434 = vmatprep.subr.mxu0 0.0
    %2435 = vmatpush1.msra.mxu0 %v2281
    %2436 = vmatprep.subr.mxu0 0.0
    %2437 = vmatpush1.msra.mxu0 %v2282
    %2438 = vmatprep.subr.mxu0 0.0
    %2439 = vmatpush1.msra.mxu0 %v2283
    %2440 = vmatprep.subr.mxu0 0.0
    %2441 = vmatpush1.msra.mxu0 %v2284
    %2442 = vmatprep.subr.mxu0 0.0
    %2443 = vmatpush1.msra.mxu0 %v2285
    %2444 = vmatprep.subr.mxu0 0.0
    %2445 = vmatpush1.msra.mxu0 %v2286
    %2446 = vmatprep.subr.mxu0 0.0
    %2447 = vmatpush1.msra.mxu0 %v2287
    %2448 = vmatprep.subr.mxu0 0.0
    %2449 = vmatpush1.msra.mxu0 %v2288
    %2450 = vmatprep.subr.mxu0 0.0
    %2451 = vmatpush1.msra.mxu0 %v2289
    %2452 = vmatprep.subr.mxu0 0.0
    %2453 = vmatpush1.msra.mxu0 %v2290
    %2454 = vmatprep.subr.mxu0 0.0
    %2455 = vmatpush1.msra.mxu0 %v2291
    %2456 = vmatprep.subr.mxu0 0.0
    %2457 = vmatpush1.msra.mxu0 %v2292
    %2458 = vmatprep.subr.mxu0 0.0
    %2459 = vmatpush1.msra.mxu0 %v2293
    %2460 = vmatprep.mubr.f32.mxu0 %v2227
    %2461 = vmatmul.mubr.f32.gmra.mrb[0].mxu0 %v2226
    %v2462 = vpop.f32.mrb[0].mxu0
    %v2463 = vadd.f32 %v2393, %v2462
    %v2464 = vpop.f32.mrb[0].mxu0
    %2465 = vdwg.mxu0
    %2466 = vmatprep.subr.mxu0 0.0
    %2467 = vmatpush1.msra.mxu0 %v2294
    %2468 = vmatprep.subr.mxu0 0.0
    %2469 = vmatpush1.msra.mxu0 %v2295
    %2470 = vmatprep.subr.mxu0 0.0
    %2471 = vmatpush1.msra.mxu0 %v2296
    %2472 = vmatprep.subr.mxu0 0.0
    %2473 = vmatpush1.msra.mxu0 %v2297
    %2474 = vmatprep.subr.mxu0 0.0
    %2475 = vmatpush1.msra.mxu0 %v2298
    %2476 = vmatprep.subr.mxu0 0.0
    %2477 = vmatpush1.msra.mxu0 %v2299
    %2478 = vmatprep.subr.mxu0 0.0
    %2479 = vmatpush1.msra.mxu0 %v2300
    %2480 = vmatprep.subr.mxu0 0.0
    %2481 = vmatpush1.msra.mxu0 %v2301
    %2482 = vmatprep.subr.mxu0 0.0
    %2483 = vmatpush1.msra.mxu0 %v2302
    %2484 = vmatprep.subr.mxu0 0.0
    %2485 = vmatpush1.msra.mxu0 %v2303
    %2486 = vmatprep.subr.mxu0 0.0
    %2487 = vmatpush1.msra.mxu0 %v2304
    %2488 = vmatprep.subr.mxu0 0.0
    %2489 = vmatpush1.msra.mxu0 %v2305
    %2490 = vmatprep.subr.mxu0 0.0
    %2491 = vmatpush1.msra.mxu0 %v2306
    %2492 = vmatprep.subr.mxu0 0.0
    %2493 = vmatpush1.msra.mxu0 %v2307
    %2494 = vmatprep.subr.mxu0 0.0
    %2495 = vmatpush1.msra.mxu0 %v2308
    %2496 = vmatprep.subr.mxu0 0.0
    %2497 = vmatpush1.msra.mxu0 %v2309
    %2498 = vmatprep.subr.mxu0 0.0
    %2499 = vmatpush1.msra.mxu0 %v2310
    %2500 = vmatprep.subr.mxu0 0.0
    %2501 = vmatpush1.msra.mxu0 %v2311
    %2502 = vmatprep.subr.mxu0 0.0
    %2503 = vmatpush1.msra.mxu0 %v2312
    %2504 = vmatprep.subr.mxu0 0.0
    %2505 = vmatpush1.msra.mxu0 %v2313
    %2506 = vmatprep.subr.mxu0 0.0
    %2507 = vmatpush1.msra.mxu0 %v2314
    %2508 = vmatprep.subr.mxu0 0.0
    %2509 = vmatpush1.msra.mxu0 %v2315
    %2510 = vmatprep.subr.mxu0 0.0
    %2511 = vmatpush1.msra.mxu0 %v2316
    %2512 = vmatprep.subr.mxu0 0.0
    %2513 = vmatpush1.msra.mxu0 %v2317
    %2514 = vmatprep.subr.mxu0 0.0
    %2515 = vmatpush1.msra.mxu0 %v2318
    %2516 = vmatprep.subr.mxu0 0.0
    %2517 = vmatpush1.msra.mxu0 %v2319
    %2518 = vmatprep.subr.mxu0 0.0
    %2519 = vmatpush1.msra.mxu0 %v2320
    %2520 = vmatprep.subr.mxu0 0.0
    %2521 = vmatpush1.msra.mxu0 %v2321
    %2522 = vmatprep.subr.mxu0 0.0
    %2523 = vmatpush1.msra.mxu0 %v2322
    %2524 = vmatprep.subr.mxu0 0.0
    %2525 = vmatpush1.msra.mxu0 %v2323
    %2526 = vmatprep.subr.mxu0 0.0
    %2527 = vmatpush1.msra.mxu0 %v2324
    %2528 = vmatprep.subr.mxu0 0.0
    %2529 = vmatpush1.msra.mxu0 %v2325
    %2530 = vmatprep.mubr.f32.mxu0 %v2229
    %2531 = vmatmul.mubr.f32.gmra.mrb[0].mxu0 %v2228
    %v2532 = vpop.f32.mrb[0].mxu0
    %v2533 = vadd.f32 %v2463, %v2532
    %v2534 = vpop.f32.mrb[0].mxu0
    %2535 = vdwg.mxu0
    %p2536 = scmp.eq.s32.totalorder 0, 0
    // Predicated region
    $region38: #{codesecura_head.1} parent=1 // pred_check
      %p2537 = pneg %p2536
    $region39: #{codesecura_head.1} parent=1 // pred_check_branch
      %2539 = sbr.rel (%p2537) target = $region41
    $region40: #{codesecura_head.1} parent=1 // pred_region
      %v2540 = vld [vmem:[#allocation7] sm:$0x1]
      %v2542 = vlaneseq
      %v2543 = vshrl.u32 %v2542, 7
      %v2544 = vsub.s32 0, %v2543
      %v2545 = vrot.slane %v2540, %v2544
      %v2547 = vadd.f32 %v2533, %v2545
      %2548 = vst [vmem:[%s5] sm:$0xff] %v2547
    $region41: #{codesecura_head.1} parent=1 // pred_fallthru
      _
    %p2549 = scmp.ne.s32.totalorder 0, 0
    // Predicated region
    $region42: #{codesecura_head.1} parent=1 // pred_check
      %p2550 = pneg %p2549
    $region43: #{codesecura_head.1} parent=1 // pred_check_branch
      %2552 = sbr.rel (%p2550) target = $region45
    $region44: #{codesecura_head.1} parent=1 // pred_region
      %2553 = vst [vmem:[%s5] sm:$0xff] %v2533
    $region45: #{codesecura_head.1} parent=1 // pred_fallthru
      _
    // Predicated region
    $region46: #{codesecura_head.1} parent=1 // pred_check
      _
    $region47: #{codesecura_head.1} parent=1 // pred_check_branch
      %2555 = sbr.rel (0) target = $region49
    $region48: #{codesecura_head.1} parent=1 // pred_region
      _
    $region49: #{codesecura_head.1} parent=1 // pred_fallthru
      _
    // Predicated region
    $region50: #{codesecura_head.1} parent=1 // pred_check
      _
    $region51: #{codesecura_head.1} parent=1 // pred_check_branch
      %2557 = sbr.rel (0) target = $region53
    $region52: #{codesecura_head.1} parent=1 // pred_region
      _
    $region53: #{codesecura_head.1} parent=1 // pred_fallthru
      _
    %2558 = vsyncpa [#allocation3], 1
    %2559 = vsyncpa [#allocation5], 1
    %2560 = vsyncpa [#allocation8], 1

</llo_original>
